<compile_context>
chip_gen: v6e
topology: v6e:2x2x1
jax: 0.10.0
libtpu: 0.0.40
codegen_flags: <defaults>
</compile_context>

<pallas_src>
import functools

import jax
import jax.numpy as jnp
from jax.experimental import pallas as pl
from jax.experimental.pallas import tpu as pltpu


# ----------------------------- Pallas kernel -------------------------------

def _reslayer_kernel(x_ref, m1_ref, b1_ref, m2_ref, b2_ref, m3_ref, b3_ref,
                     o_ref, *, H, mxu_dtype):
    """Fused ResLayer on a row block holding a whole number of images.

    x_ref : (R, W*Cin)            lane-dense activations, R = (#images)*H, f32
    mK_ref: (3, W*CinK, W*CoutK)  block-Toeplitz conv weights, one per kernel row
    bK_ref: (1, W*CoutK)          bias tiled across the W pixels, f32
    o_ref : (R, W*Cout)           lane-dense output, f32
    """
    x = x_ref[...]                                           # (R, W*Cin) f32
    rows = x.shape[0]

    # Height-halo masks: after rolling the per-tap matmul outputs along the
    # sublane axis, zero the single row per image that wrapped across an
    # image boundary (reproduces 'same' padding in H without any padded copy).
    row_ids = jax.lax.broadcasted_iota(jnp.int32, (rows, 1), 0)
    not_first = (row_ids % H != 0).astype(jnp.float32)       # gates the dy=0 tap
    not_last = (row_ids % H != H - 1).astype(jnp.float32)    # gates the dy=2 tap

    def conv3x3(a, m_ref, b_ref, relu):
        # Single bf16 cast per conv on the un-padded, (8,128)-aligned tile;
        # f32 accumulation on the MXU, everything elementwise stays f32.
        a_lo = a.astype(mxu_dtype)
        p0 = jnp.dot(a_lo, m_ref[0], preferred_element_type=jnp.float32)
        p1 = jnp.dot(a_lo, m_ref[1], preferred_element_type=jnp.float32)
        p2 = jnp.dot(a_lo, m_ref[2], preferred_element_type=jnp.float32)
        # out[r] = p0[r-1] + p1[r] + p2[r+1]  -- row halo via XLU roll + mask.
        acc = p1 + b_ref[...]
        acc = acc + pltpu.roll(p0, shift=1, axis=0) * not_first
        acc = acc + pltpu.roll(p2, shift=rows - 1, axis=0) * not_last
        if relu:
            acc = jnp.maximum(acc, 0.0)
        return acc

    y = conv3x3(x, m1_ref, b1_ref, relu=True)
    y = conv3x3(y, m2_ref, b2_ref, relu=True)
    y = conv3x3(y, m3_ref, b3_ref, relu=False)
    o_ref[...] = x + y                                       # residual (f32 input)


# ----------------------------- wrappers --------------------------------------

def _toeplitz_conv_weights(w, W, dtype):
    """(3,3,Cin,Cout) conv weights -> (3, W*Cin, W*Cout) block-Toeplitz matrices.

    For output pixel o, input pixel q contributes with tap dx = q - o + 1
    ('same' padding of 1, cross-correlation as in nn.Conv2d); out-of-range
    taps are zeroed, which folds the width halo into the weight matrix.
    """
    Cin, Cout = w.shape[2], w.shape[3]
    q = jnp.arange(W)[:, None]
    o = jnp.arange(W)[None, :]
    dx = q - o + 1
    valid = (dx >= 0) & (dx <= 2)
    dxc = jnp.clip(dx, 0, 2)
    rows = []
    for dy in range(3):
        m = jnp.where(valid[:, :, None, None], w[dy][dxc], 0.0)  # (W,W,Cin,Cout)
        rows.append(m.transpose(0, 2, 1, 3).reshape(W * Cin, W * Cout))
    return jnp.stack(rows, axis=0).astype(dtype)


def reslayer_forward_lane_dense(x2d, params, *, H, W, mxu_dtype=jnp.bfloat16,
                                grid_blocks=1):
    """ResLayer on lane-dense activations.

    x2d: (B*H, W*Cin) f32, rows of each image contiguous.  Chain this entry
    point between ResLayers to avoid NCHW<->NHWC HBM round trips.
    grid_blocks: number of row blocks (each holding whole images).  Use 1 on
    single-TensorCore v5e/v6e; 2 on v7x so both TensorCores get work.
    """
    BH, WCin = x2d.shape
    Cin = WCin // W
    B = BH // H
    Cmid = params["w1"].shape[3]
    Cout = params["w3"].shape[3]
    assert Cin == Cout, "ResLayer residual add requires in_channel == out_channel"
    assert BH == B * H and WCin == W * Cin, "x2d shape must be (B*H, W*Cin)"
    assert B % grid_blocks == 0, "each grid block must hold whole images"
    # Lane-dense I/O wants W*C to be a multiple of 128 (else masked stores /
    # block-divisibility issues).  The ISRDAR config (W=16, C=8) gives 128.
    assert (W * Cin) % 128 == 0 and (W * Cout) % 128 == 0, \
        "W*C must be a multiple of 128 lanes for this kernel"
    rows_blk = (B // grid_blocks) * H
    if grid_blocks > 1:
        assert rows_blk % 8 == 0, "row block must be sublane-aligned"

    m1 = _toeplitz_conv_weights(params["w1"], W, mxu_dtype)
    m2 = _toeplitz_conv_weights(params["w2"], W, mxu_dtype)
    m3 = _toeplitz_conv_weights(params["w3"], W, mxu_dtype)
    b1 = jnp.tile(params["b1"].astype(jnp.float32), W).reshape(1, W * Cmid)
    b2 = jnp.tile(params["b2"].astype(jnp.float32), W).reshape(1, W * Cout)
    b3 = jnp.tile(params["b3"].astype(jnp.float32), W).reshape(1, W * Cout)

    flops = 2 * 3 * BH * (W * Cin * W * Cmid
                          + W * Cmid * W * Cout
                          + W * Cout * W * Cout)
    bytes_accessed = (4 * (x2d.size + BH * W * Cout + b1.size + b2.size + b3.size)
                      + (m1.size + m2.size + m3.size) * jnp.dtype(mxu_dtype).itemsize)

    kern = functools.partial(_reslayer_kernel, H=H, mxu_dtype=mxu_dtype)
    out = pl.pallas_call(
        kern,
        out_shape=jax.ShapeDtypeStruct((BH, W * Cout), jnp.float32),
        grid=(grid_blocks,),
        in_specs=[
            pl.BlockSpec((rows_blk, W * Cin), lambda i: (i, 0)),
            # Weights/biases are grid-invariant (constant block index); at
            # grid_blocks=1 there is a single step, so no re-fetch cost.
            pl.BlockSpec((3, W * Cin, W * Cmid), lambda i: (0, 0, 0)),
            pl.BlockSpec((1, W * Cmid), lambda i: (0, 0)),
            pl.BlockSpec((3, W * Cmid, W * Cout), lambda i: (0, 0, 0)),
            pl.BlockSpec((1, W * Cout), lambda i: (0, 0)),
            pl.BlockSpec((3, W * Cout, W * Cout), lambda i: (0, 0, 0)),
            pl.BlockSpec((1, W * Cout), lambda i: (0, 0)),
        ],
        out_specs=pl.BlockSpec((rows_blk, W * Cout), lambda i: (i, 0)),
        compiler_params=pltpu.CompilerParams(dimension_semantics=("parallel",)),
        cost_estimate=pl.CostEstimate(flops=int(flops), transcendentals=0,
                                      bytes_accessed=int(bytes_accessed)),
    )(x2d, m1, b1, m2, b2, m3, b3)
    return out


def reslayer_forward(x_nchw, params, *, mxu_dtype=jnp.bfloat16, grid_blocks=1):
    """NCHW convenience wrapper matching the PyTorch module's interface.

    Layout is converted exactly once here; a full ISRDAR stack should keep
    activations lane-dense between layers and chain
    `reslayer_forward_lane_dense` to avoid per-layer transpose HBM traffic.
    """
    B, Cin, H, W = x_nchw.shape
    Cout = params["w3"].shape[3]
    x2d = (jnp.transpose(x_nchw, (0, 2, 3, 1))
           .reshape(B * H, W * Cin).astype(jnp.float32))
    out2d = reslayer_forward_lane_dense(x2d, params, H=H, W=W,
                                        mxu_dtype=mxu_dtype,
                                        grid_blocks=grid_blocks)
    return jnp.transpose(out2d.reshape(B, H, W, Cout), (0, 3, 1, 2))   # -> NCHW


# ----------------------------- pure-JAX reference ---------------------------

def reslayer_reference(x_nchw, params):
    x = jnp.transpose(x_nchw, (0, 2, 3, 1)).astype(jnp.float32)

    def conv(a, w, b):
        y = jax.lax.conv_general_dilated(
            a, w, window_strides=(1, 1), padding="SAME",
            dimension_numbers=("NHWC", "HWIO", "NHWC"))
        return y + b

    y = jax.nn.relu(conv(x, params["w1"], params["b1"]))
    y = jax.nn.relu(conv(y, params["w2"], params["b2"]))
    y = conv(y, params["w3"], params["b3"])
    return jnp.transpose(x + y, (0, 3, 1, 2))


# ----------------------------- parameter init -------------------------------

def init_reslayer_params(key, in_channel, out_channel, reduction, std=0.05):
    # Weights stored as (kh, kw, Cin, Cout) == torch_weight.permute(2, 3, 1, 0).
    mid = out_channel // reduction
    ks = jax.random.split(key, 6)
    nrm = lambda k, shape: jax.random.normal(k, shape, jnp.float32) * std
    return {
        "w1": nrm(ks[0], (3, 3, in_channel, mid)),
        "b1": nrm(ks[1], (mid,)),
        "w2": nrm(ks[2], (3, 3, mid, out_channel)),
        "b2": nrm(ks[3], (out_channel,)),
        "w3": nrm(ks[4], (3, 3, out_channel, out_channel)),
        "b3": nrm(ks[5], (out_channel,)),
    }


# ----------------------------- main ------------------------------------------

if __name__ == "__main__":
    key = jax.random.PRNGKey(0)
    kx, kp = jax.random.split(key)

    # ResLayer(in_channel=8, out_channel=8, reduction=4), as instantiated by
    # ISRDAR (n_feats=8, reduction=4); B=2, 16x16 spatial -> 128 lanes,
    # 32 matmul rows with batch folded into M.
    B, C, H, W, reduction = 2, 8, 16, 16, 4
    params = init_reslayer_params(kp, C, C, reduction)
    x = jax.random.normal(kx, (B, C, H, W), jnp.float32)

    # grid_blocks=1 is the right setting for single-TC v5e/v6e; on v7x pass
    # grid_blocks=2 so each TensorCore takes one image.
    fwd = jax.jit(functools.partial(reslayer_forward,
                                    mxu_dtype=jnp.bfloat16, grid_blocks=1))
    out = fwd(x, params)
    jax.block_until_ready(out)

    assert out.shape == (B, C, H, W), out.shape
    assert bool(jnp.all(jnp.isfinite(out)))

    ref = reslayer_reference(x, params)
    max_err = float(jnp.max(jnp.abs(out - ref)))
    assert max_err < 5e-2, f"max abs error vs reference: {max_err}"

    print("KERNEL_OK")
</pallas_src>

<mosaic_0001>
module attributes {stable_mosaic.version = 11 : i64} {
  func.func @_reslayer_kernel(%arg0: i32, %arg1: memref<32x128xf32, #tpu.memory_space<vmem>>, %arg2: memref<3x128x32xbf16, #tpu.memory_space<vmem>>, %arg3: memref<1x32xf32, #tpu.memory_space<vmem>>, %arg4: memref<3x32x128xbf16, #tpu.memory_space<vmem>>, %arg5: memref<1x128xf32, #tpu.memory_space<vmem>>, %arg6: memref<3x128x128xbf16, #tpu.memory_space<vmem>>, %arg7: memref<1x128xf32, #tpu.memory_space<vmem>>, %arg8: memref<32x128xf32, #tpu.memory_space<vmem>>) attributes {dimension_semantics = [#tpu.dimension_semantics<parallel>], iteration_bounds = array<i64: 1>, scalar_prefetch = 0 : i64, scratch_operands = 0 : i64, tpu.core_type = #tpu.core_type<tc>, window_params = [{transform_indices = @transform_0, window_bounds = array<i64: 32, 128>}, {pipeline_mode = #tpu.pipeline_mode<synchronous>, transform_indices = @transform_1, window_bounds = array<i64: 3, 128, 32>}, {pipeline_mode = #tpu.pipeline_mode<synchronous>, transform_indices = @transform_2, window_bounds = array<i64: 1, 32>}, {pipeline_mode = #tpu.pipeline_mode<synchronous>, transform_indices = @transform_3, window_bounds = array<i64: 3, 32, 128>}, {pipeline_mode = #tpu.pipeline_mode<synchronous>, transform_indices = @transform_4, window_bounds = array<i64: 1, 128>}, {pipeline_mode = #tpu.pipeline_mode<synchronous>, transform_indices = @transform_5, window_bounds = array<i64: 3, 128, 128>}, {pipeline_mode = #tpu.pipeline_mode<synchronous>, transform_indices = @transform_6, window_bounds = array<i64: 1, 128>}, {transform_indices = @transform_7, window_bounds = array<i64: 32, 128>}]} {
    %c0 = arith.constant 0 : index
    %c0_0 = arith.constant 0 : index
    %0 = vector.load %arg1[%c0, %c0_0] : memref<32x128xf32, #tpu.memory_space<vmem>>, vector<32x128xf32>
    %1 = tpu.iota {dimensions = array<i32: 0>} : vector<32x1xi32>
    %c16_i32 = arith.constant 16 : i32
    %c0_i32 = arith.constant 0 : i32
    %2 = arith.cmpi eq, %c16_i32, %c0_i32 : i32
    %c1_i32 = arith.constant 1 : i32
    %3 = arith.select %2, %c1_i32, %c16_i32 : i32
    %4 = vector.broadcast %3 : i32 to vector<32x1xi32>
    %5 = arith.remsi %1, %4 : vector<32x1xi32>
    %c0_i32_1 = arith.constant 0 : i32
    %6 = vector.broadcast %c0_i32_1 : i32 to vector<32x1xi32>
    %7 = arith.cmpi ne, %5, %6 : vector<32x1xi32>
    %c0_i32_2 = arith.constant 0 : i32
    %8 = vector.broadcast %c0_i32_2 : i32 to vector<32x1xi32>
    %9 = arith.cmpi slt, %5, %8 : vector<32x1xi32>
    %c0_i32_3 = arith.constant 0 : i32
    %10 = arith.cmpi slt, %3, %c0_i32_3 : i32
    %11 = vector.broadcast %10 : i1 to vector<32x1xi1>
    %12 = vector.broadcast %11 : vector<32x1xi1> to vector<32x1xi1>
    %13 = arith.xori %9, %12 : vector<32x1xi1>
    %14 = arith.andi %13, %7 : vector<32x1xi1>
    %15 = vector.broadcast %3 : i32 to vector<32x1xi32>
    %16 = arith.addi %5, %15 : vector<32x1xi32>
    %17 = arith.select %14, %16, %5 : vector<32x1xi1>, vector<32x1xi32>
    %c0_i32_4 = arith.constant 0 : i32
    %18 = vector.broadcast %c0_i32_4 : i32 to vector<32x1xi32>
    %19 = arith.cmpi ne, %17, %18 : vector<32x1xi32>
    %20 = arith.extui %19 : vector<32x1xi1> to vector<32x1xi32>
    %21 = arith.sitofp %20 : vector<32x1xi32> to vector<32x1xf32>
    %c16_i32_5 = arith.constant 16 : i32
    %c0_i32_6 = arith.constant 0 : i32
    %22 = arith.cmpi eq, %c16_i32_5, %c0_i32_6 : i32
    %c1_i32_7 = arith.constant 1 : i32
    %23 = arith.select %22, %c1_i32_7, %c16_i32_5 : i32
    %24 = vector.broadcast %23 : i32 to vector<32x1xi32>
    %25 = arith.remsi %1, %24 : vector<32x1xi32>
    %c0_i32_8 = arith.constant 0 : i32
    %26 = vector.broadcast %c0_i32_8 : i32 to vector<32x1xi32>
    %27 = arith.cmpi ne, %25, %26 : vector<32x1xi32>
    %c0_i32_9 = arith.constant 0 : i32
    %28 = vector.broadcast %c0_i32_9 : i32 to vector<32x1xi32>
    %29 = arith.cmpi slt, %25, %28 : vector<32x1xi32>
    %c0_i32_10 = arith.constant 0 : i32
    %30 = arith.cmpi slt, %23, %c0_i32_10 : i32
    %31 = vector.broadcast %30 : i1 to vector<32x1xi1>
    %32 = vector.broadcast %31 : vector<32x1xi1> to vector<32x1xi1>
    %33 = arith.xori %29, %32 : vector<32x1xi1>
    %34 = arith.andi %33, %27 : vector<32x1xi1>
    %35 = vector.broadcast %23 : i32 to vector<32x1xi32>
    %36 = arith.addi %25, %35 : vector<32x1xi32>
    %37 = arith.select %34, %36, %25 : vector<32x1xi1>, vector<32x1xi32>
    %c15_i32 = arith.constant 15 : i32
    %38 = vector.broadcast %c15_i32 : i32 to vector<32x1xi32>
    %39 = arith.cmpi ne, %37, %38 : vector<32x1xi32>
    %40 = arith.extui %39 : vector<32x1xi1> to vector<32x1xi32>
    %41 = arith.sitofp %40 : vector<32x1xi32> to vector<32x1xf32>
    %42 = arith.truncf %0 : vector<32x128xf32> to vector<32x128xbf16>
    %c0_11 = arith.constant 0 : index
    %c0_12 = arith.constant 0 : index
    %c0_13 = arith.constant 0 : index
    %43 = vector.load %arg2[%c0_11, %c0_12, %c0_13] : memref<3x128x32xbf16, #tpu.memory_space<vmem>>, vector<1x128x32xbf16>
    %44 = vector.shape_cast %43 : vector<1x128x32xbf16> to vector<128x32xbf16>
    %cst = arith.constant dense<0.000000e+00> : vector<32x32xf32>
    %45 = tpu.matmul %42, %44, %cst {dimension_numbers = #tpu.dot_dimension_numbers<[1], [0], [0], [1], [0, 0, 1, 1], [], []>} : vector<32x128xbf16>, vector<128x32xbf16>, vector<32x32xf32> -> vector<32x32xf32>
    %c1 = arith.constant 1 : index
    %c0_14 = arith.constant 0 : index
    %c0_15 = arith.constant 0 : index
    %46 = vector.load %arg2[%c1, %c0_14, %c0_15] : memref<3x128x32xbf16, #tpu.memory_space<vmem>>, vector<1x128x32xbf16>
    %47 = vector.shape_cast %46 : vector<1x128x32xbf16> to vector<128x32xbf16>
    %cst_16 = arith.constant dense<0.000000e+00> : vector<32x32xf32>
    %48 = tpu.matmul %42, %47, %cst_16 {dimension_numbers = #tpu.dot_dimension_numbers<[1], [0], [0], [1], [0, 0, 1, 1], [], []>} : vector<32x128xbf16>, vector<128x32xbf16>, vector<32x32xf32> -> vector<32x32xf32>
    %c2 = arith.constant 2 : index
    %c0_17 = arith.constant 0 : index
    %c0_18 = arith.constant 0 : index
    %49 = vector.load %arg2[%c2, %c0_17, %c0_18] : memref<3x128x32xbf16, #tpu.memory_space<vmem>>, vector<1x128x32xbf16>
    %50 = vector.shape_cast %49 : vector<1x128x32xbf16> to vector<128x32xbf16>
    %cst_19 = arith.constant dense<0.000000e+00> : vector<32x32xf32>
    %51 = tpu.matmul %42, %50, %cst_19 {dimension_numbers = #tpu.dot_dimension_numbers<[1], [0], [0], [1], [0, 0, 1, 1], [], []>} : vector<32x128xbf16>, vector<128x32xbf16>, vector<32x32xf32> -> vector<32x32xf32>
    %c0_20 = arith.constant 0 : index
    %c0_21 = arith.constant 0 : index
    %52 = vector.load %arg3[%c0_20, %c0_21] : memref<1x32xf32, #tpu.memory_space<vmem>>, vector<1x32xf32>
    %53 = vector.broadcast %52 : vector<1x32xf32> to vector<32x32xf32>
    %54 = arith.addf %48, %53 : vector<32x32xf32>
    %c1_i32_22 = arith.constant 1 : i32
    %55 = tpu.dynamic_rotate %45 by %c1_i32_22 dim 0 : vector<32x32xf32>, i32 -> vector<32x32xf32>
    %56 = vector.broadcast %21 : vector<32x1xf32> to vector<32x32xf32>
    %57 = arith.mulf %55, %56 : vector<32x32xf32>
    %58 = arith.addf %54, %57 : vector<32x32xf32>
    %c31_i32 = arith.constant 31 : i32
    %59 = tpu.dynamic_rotate %51 by %c31_i32 dim 0 : vector<32x32xf32>, i32 -> vector<32x32xf32>
    %60 = vector.broadcast %41 : vector<32x1xf32> to vector<32x32xf32>
    %61 = arith.mulf %59, %60 : vector<32x32xf32>
    %62 = arith.addf %58, %61 : vector<32x32xf32>
    %cst_23 = arith.constant 0.000000e+00 : f32
    %63 = vector.broadcast %cst_23 : f32 to vector<32x32xf32>
    %64 = arith.maximumf %62, %63 : vector<32x32xf32>
    %65 = arith.truncf %64 : vector<32x32xf32> to vector<32x32xbf16>
    %c0_24 = arith.constant 0 : index
    %c0_25 = arith.constant 0 : index
    %c0_26 = arith.constant 0 : index
    %66 = vector.load %arg4[%c0_24, %c0_25, %c0_26] : memref<3x32x128xbf16, #tpu.memory_space<vmem>>, vector<1x32x128xbf16>
    %67 = vector.shape_cast %66 : vector<1x32x128xbf16> to vector<32x128xbf16>
    %cst_27 = arith.constant dense<0.000000e+00> : vector<32x128xf32>
    %68 = tpu.matmul %65, %67, %cst_27 {dimension_numbers = #tpu.dot_dimension_numbers<[1], [0], [0], [1], [0, 0, 1, 1], [], []>} : vector<32x32xbf16>, vector<32x128xbf16>, vector<32x128xf32> -> vector<32x128xf32>
    %c1_28 = arith.constant 1 : index
    %c0_29 = arith.constant 0 : index
    %c0_30 = arith.constant 0 : index
    %69 = vector.load %arg4[%c1_28, %c0_29, %c0_30] : memref<3x32x128xbf16, #tpu.memory_space<vmem>>, vector<1x32x128xbf16>
    %70 = vector.shape_cast %69 : vector<1x32x128xbf16> to vector<32x128xbf16>
    %cst_31 = arith.constant dense<0.000000e+00> : vector<32x128xf32>
    %71 = tpu.matmul %65, %70, %cst_31 {dimension_numbers = #tpu.dot_dimension_numbers<[1], [0], [0], [1], [0, 0, 1, 1], [], []>} : vector<32x32xbf16>, vector<32x128xbf16>, vector<32x128xf32> -> vector<32x128xf32>
    %c2_32 = arith.constant 2 : index
    %c0_33 = arith.constant 0 : index
    %c0_34 = arith.constant 0 : index
    %72 = vector.load %arg4[%c2_32, %c0_33, %c0_34] : memref<3x32x128xbf16, #tpu.memory_space<vmem>>, vector<1x32x128xbf16>
    %73 = vector.shape_cast %72 : vector<1x32x128xbf16> to vector<32x128xbf16>
    %cst_35 = arith.constant dense<0.000000e+00> : vector<32x128xf32>
    %74 = tpu.matmul %65, %73, %cst_35 {dimension_numbers = #tpu.dot_dimension_numbers<[1], [0], [0], [1], [0, 0, 1, 1], [], []>} : vector<32x32xbf16>, vector<32x128xbf16>, vector<32x128xf32> -> vector<32x128xf32>
    %c0_36 = arith.constant 0 : index
    %c0_37 = arith.constant 0 : index
    %75 = vector.load %arg5[%c0_36, %c0_37] : memref<1x128xf32, #tpu.memory_space<vmem>>, vector<1x128xf32>
    %76 = vector.broadcast %75 : vector<1x128xf32> to vector<32x128xf32>
    %77 = arith.addf %71, %76 : vector<32x128xf32>
    %c1_i32_38 = arith.constant 1 : i32
    %78 = tpu.dynamic_rotate %68 by %c1_i32_38 dim 0 : vector<32x128xf32>, i32 -> vector<32x128xf32>
    %79 = vector.broadcast %21 : vector<32x1xf32> to vector<32x128xf32>
    %80 = arith.mulf %78, %79 : vector<32x128xf32>
    %81 = arith.addf %77, %80 : vector<32x128xf32>
    %c31_i32_39 = arith.constant 31 : i32
    %82 = tpu.dynamic_rotate %74 by %c31_i32_39 dim 0 : vector<32x128xf32>, i32 -> vector<32x128xf32>
    %83 = vector.broadcast %41 : vector<32x1xf32> to vector<32x128xf32>
    %84 = arith.mulf %82, %83 : vector<32x128xf32>
    %85 = arith.addf %81, %84 : vector<32x128xf32>
    %cst_40 = arith.constant 0.000000e+00 : f32
    %86 = vector.broadcast %cst_40 : f32 to vector<32x128xf32>
    %87 = arith.maximumf %85, %86 : vector<32x128xf32>
    %88 = arith.truncf %87 : vector<32x128xf32> to vector<32x128xbf16>
    %c0_41 = arith.constant 0 : index
    %c0_42 = arith.constant 0 : index
    %c0_43 = arith.constant 0 : index
    %89 = vector.load %arg6[%c0_41, %c0_42, %c0_43] : memref<3x128x128xbf16, #tpu.memory_space<vmem>>, vector<1x128x128xbf16>
    %90 = vector.shape_cast %89 : vector<1x128x128xbf16> to vector<128x128xbf16>
    %cst_44 = arith.constant dense<0.000000e+00> : vector<32x128xf32>
    %91 = tpu.matmul %88, %90, %cst_44 {dimension_numbers = #tpu.dot_dimension_numbers<[1], [0], [0], [1], [0, 0, 1, 1], [], []>} : vector<32x128xbf16>, vector<128x128xbf16>, vector<32x128xf32> -> vector<32x128xf32>
    %c1_45 = arith.constant 1 : index
    %c0_46 = arith.constant 0 : index
    %c0_47 = arith.constant 0 : index
    %92 = vector.load %arg6[%c1_45, %c0_46, %c0_47] : memref<3x128x128xbf16, #tpu.memory_space<vmem>>, vector<1x128x128xbf16>
    %93 = vector.shape_cast %92 : vector<1x128x128xbf16> to vector<128x128xbf16>
    %cst_48 = arith.constant dense<0.000000e+00> : vector<32x128xf32>
    %94 = tpu.matmul %88, %93, %cst_48 {dimension_numbers = #tpu.dot_dimension_numbers<[1], [0], [0], [1], [0, 0, 1, 1], [], []>} : vector<32x128xbf16>, vector<128x128xbf16>, vector<32x128xf32> -> vector<32x128xf32>
    %c2_49 = arith.constant 2 : index
    %c0_50 = arith.constant 0 : index
    %c0_51 = arith.constant 0 : index
    %95 = vector.load %arg6[%c2_49, %c0_50, %c0_51] : memref<3x128x128xbf16, #tpu.memory_space<vmem>>, vector<1x128x128xbf16>
    %96 = vector.shape_cast %95 : vector<1x128x128xbf16> to vector<128x128xbf16>
    %cst_52 = arith.constant dense<0.000000e+00> : vector<32x128xf32>
    %97 = tpu.matmul %88, %96, %cst_52 {dimension_numbers = #tpu.dot_dimension_numbers<[1], [0], [0], [1], [0, 0, 1, 1], [], []>} : vector<32x128xbf16>, vector<128x128xbf16>, vector<32x128xf32> -> vector<32x128xf32>
    %c0_53 = arith.constant 0 : index
    %c0_54 = arith.constant 0 : index
    %98 = vector.load %arg7[%c0_53, %c0_54] : memref<1x128xf32, #tpu.memory_space<vmem>>, vector<1x128xf32>
    %99 = vector.broadcast %98 : vector<1x128xf32> to vector<32x128xf32>
    %100 = arith.addf %94, %99 : vector<32x128xf32>
    %c1_i32_55 = arith.constant 1 : i32
    %101 = tpu.dynamic_rotate %91 by %c1_i32_55 dim 0 : vector<32x128xf32>, i32 -> vector<32x128xf32>
    %102 = vector.broadcast %21 : vector<32x1xf32> to vector<32x128xf32>
    %103 = arith.mulf %101, %102 : vector<32x128xf32>
    %104 = arith.addf %100, %103 : vector<32x128xf32>
    %c31_i32_56 = arith.constant 31 : i32
    %105 = tpu.dynamic_rotate %97 by %c31_i32_56 dim 0 : vector<32x128xf32>, i32 -> vector<32x128xf32>
    %106 = vector.broadcast %41 : vector<32x1xf32> to vector<32x128xf32>
    %107 = arith.mulf %105, %106 : vector<32x128xf32>
    %108 = arith.addf %104, %107 : vector<32x128xf32>
    %109 = arith.addf %0, %108 : vector<32x128xf32>
    %c0_57 = arith.constant 0 : index
    %c0_58 = arith.constant 0 : index
    %110 = vector.load %arg8[%c0_57, %c0_58] : memref<32x128xf32, #tpu.memory_space<vmem>>, vector<32x128xf32>
    tpu.vector_store %arg8[%c0_57, %c0_58], %109 {strides = array<i32>} : memref<32x128xf32, #tpu.memory_space<vmem>>, vector<32x128xf32>,
    return
  }
  func.func @transform_0(%arg0: i32) -> (i32, i32) {
    %c0_i32 = arith.constant 0 : i32
    %c0_i32_0 = arith.constant 0 : i32
    return %arg0, %c0_i32 : i32, i32
  }
  func.func @transform_1(%arg0: i32) -> (i32, i32, i32) {
    %c0_i32 = arith.constant 0 : i32
    %c0_i32_0 = arith.constant 0 : i32
    %c0_i32_1 = arith.constant 0 : i32
    %c0_i32_2 = arith.constant 0 : i32
    return %c0_i32, %c0_i32_0, %c0_i32_1 : i32, i32, i32
  }
  func.func @transform_2(%arg0: i32) -> (i32, i32) {
    %c0_i32 = arith.constant 0 : i32
    %c0_i32_0 = arith.constant 0 : i32
    %c0_i32_1 = arith.constant 0 : i32
    return %c0_i32, %c0_i32_0 : i32, i32
  }
  func.func @transform_3(%arg0: i32) -> (i32, i32, i32) {
    %c0_i32 = arith.constant 0 : i32
    %c0_i32_0 = arith.constant 0 : i32
    %c0_i32_1 = arith.constant 0 : i32
    %c0_i32_2 = arith.constant 0 : i32
    return %c0_i32, %c0_i32_0, %c0_i32_1 : i32, i32, i32
  }
  func.func @transform_4(%arg0: i32) -> (i32, i32) {
    %c0_i32 = arith.constant 0 : i32
    %c0_i32_0 = arith.constant 0 : i32
    %c0_i32_1 = arith.constant 0 : i32
    return %c0_i32, %c0_i32_0 : i32, i32
  }
  func.func @transform_5(%arg0: i32) -> (i32, i32, i32) {
    %c0_i32 = arith.constant 0 : i32
    %c0_i32_0 = arith.constant 0 : i32
    %c0_i32_1 = arith.constant 0 : i32
    %c0_i32_2 = arith.constant 0 : i32
    return %c0_i32, %c0_i32_0, %c0_i32_1 : i32, i32, i32
  }
  func.func @transform_6(%arg0: i32) -> (i32, i32) {
    %c0_i32 = arith.constant 0 : i32
    %c0_i32_0 = arith.constant 0 : i32
    %c0_i32_1 = arith.constant 0 : i32
    return %c0_i32, %c0_i32_0 : i32, i32
  }
  func.func @transform_7(%arg0: i32) -> (i32, i32) {
    %c0_i32 = arith.constant 0 : i32
    %c0_i32_0 = arith.constant 0 : i32
    return %arg0, %c0_i32 : i32, i32
  }
}

</mosaic_0001>

<llo_original>
// kernel: tile.18
$region0: #{tile.18}
  #allocation0 [shape = 's32[1]{0}', space=sflag, size = 0x4, scoped, tag = 'scoped memory for tile.18']
  %s0 = inlined_call_operand.vmem [shape: f32[2], index: 0, kind: input, shape index: {}]
  %s1 = inlined_call_operand.vmem [shape: f32[16,2], index: 1, kind: output, shape index: {}]
  // Predicated region
  $region2: #{tile.18} parent=0 // pred_check
    _
  $region3: #{tile.18} parent=0 // pred_check_branch
    %3 = sbr.rel (0) target = $region5
  $region4: #{tile.18} parent=0 // pred_region
    _
  $region5: #{tile.18} parent=0 // pred_fallthru
    _
  %v4 = vld [vmem:[%s0] ss:$0 sm:$0xff]
  %5 = vst [vmem:[%s1] sm:$0xff] %v4
  %s6 = scalar_lea.vmem %s1, 8
  %7 = vst [vmem:[%s6] sm:$0xff] %v4

// kernel: tile.19
$region0: #{tile.19}
  %s0 = inlined_call_operand.vmem [shape: f32[16,2], index: 0, kind: input, shape index: {}]
  %s1 = inlined_call_operand.vmem [shape: f32[1,32], index: 1, kind: output, shape index: {}]
  $region1: #{tile.19} parent=0
    #allocation0 [shape = 'u8[4096]{0}', space=vmem, size = 0x1000, scoped, tag = 'scoped mem for output reshape']
    %v2 = vld [vmem:[%s0] sm:$0x1]
    %vm3 = vcmask 15360
    %4 = vst.msk [vmem:[#allocation0] sm:$0x1] %vm3, %v2
    %s5 = scalar_lea.vmem %s0, 15
    %v6 = vld [vmem:[%s5] sm:$0x1]
    %7 = vrot.lane.b32.xlu0 %v6, 30
    %v8 = vpop.permute.xlu0 %7
    %vm9 = vcmask 261360
    %10 = vst.msk [vmem:[#allocation0] sm:$0x1] %vm9, %v8
    %s11 = scalar_lea.vmem %s0, 14
    %v12 = vld [vmem:[%s11] sm:$0x1]
    %13 = vrot.lane.b32.xlu0 %v12, 28
    %v14 = vpop.permute.xlu0 %13
    %vm15 = vcmask 244960
    %16 = vst.msk [vmem:[#allocation0] sm:$0x1] %vm15, %v14
    %s17 = scalar_lea.vmem %s0, 13
    %v18 = vld [vmem:[%s17] sm:$0x1]
    %19 = vrot.lane.b32.xlu0 %v18, 26
    %v20 = vpop.permute.xlu0 %19
    %vm21 = vcmask 228560
    %22 = vst.msk [vmem:[#allocation0] sm:$0x1] %vm21, %v20
    %s23 = scalar_lea.vmem %s0, 12
    %v24 = vld [vmem:[%s23] sm:$0x1]
    %25 = vrot.lane.b32.xlu0 %v24, 24
    %v26 = vpop.permute.xlu0 %25
    %vm27 = vcmask 212160
    %28 = vst.msk [vmem:[#allocation0] sm:$0x1] %vm27, %v26
    %s29 = scalar_lea.vmem %s0, 11
    %v30 = vld [vmem:[%s29] sm:$0x1]
    %31 = vrot.lane.b32.xlu0 %v30, 22
    %v32 = vpop.permute.xlu0 %31
    %vm33 = vcmask 195760
    %34 = vst.msk [vmem:[#allocation0] sm:$0x1] %vm33, %v32
    %s35 = scalar_lea.vmem %s0, 10
    %v36 = vld [vmem:[%s35] sm:$0x1]
    %37 = vrot.lane.b32.xlu0 %v36, 20
    %v38 = vpop.permute.xlu0 %37
    %vm39 = vcmask 179360
    %40 = vst.msk [vmem:[#allocation0] sm:$0x1] %vm39, %v38
    %s41 = scalar_lea.vmem %s0, 9
    %v42 = vld [vmem:[%s41] sm:$0x1]
    %43 = vrot.lane.b32.xlu0 %v42, 18
    %v44 = vpop.permute.xlu0 %43
    %vm45 = vcmask 162960
    %46 = vst.msk [vmem:[#allocation0] sm:$0x1] %vm45, %v44
    %s47 = scalar_lea.vmem %s0, 8
    %v48 = vld [vmem:[%s47] sm:$0x1]
    %49 = vrot.lane.b32.xlu0 %v48, 16
    %v50 = vpop.permute.xlu0 %49
    %vm51 = vcmask 146560
    %52 = vst.msk [vmem:[#allocation0] sm:$0x1] %vm51, %v50
    %s53 = scalar_lea.vmem %s0, 7
    %v54 = vld [vmem:[%s53] sm:$0x1]
    %55 = vrot.lane.b32.xlu0 %v54, 14
    %v56 = vpop.permute.xlu0 %55
    %vm57 = vcmask 130160
    %58 = vst.msk [vmem:[#allocation0] sm:$0x1] %vm57, %v56
    %s59 = scalar_lea.vmem %s0, 6
    %v60 = vld [vmem:[%s59] sm:$0x1]
    %61 = vrot.lane.b32.xlu0 %v60, 12
    %v62 = vpop.permute.xlu0 %61
    %vm63 = vcmask 113760
    %64 = vst.msk [vmem:[#allocation0] sm:$0x1] %vm63, %v62
    %s65 = scalar_lea.vmem %s0, 5
    %v66 = vld [vmem:[%s65] sm:$0x1]
    %67 = vrot.lane.b32.xlu0 %v66, 10
    %v68 = vpop.permute.xlu0 %67
    %vm69 = vcmask 97360
    %70 = vst.msk [vmem:[#allocation0] sm:$0x1] %vm69, %v68
    %s71 = scalar_lea.vmem %s0, 4
    %v72 = vld [vmem:[%s71] sm:$0x1]
    %73 = vrot.lane.b32.xlu0 %v72, 8
    %v74 = vpop.permute.xlu0 %73
    %vm75 = vcmask 80960
    %76 = vst.msk [vmem:[#allocation0] sm:$0x1] %vm75, %v74
    %s77 = scalar_lea.vmem %s0, 3
    %v78 = vld [vmem:[%s77] sm:$0x1]
    %79 = vrot.lane.b32.xlu0 %v78, 6
    %v80 = vpop.permute.xlu0 %79
    %vm81 = vcmask 64560
    %82 = vst.msk [vmem:[#allocation0] sm:$0x1] %vm81, %v80
    %s83 = scalar_lea.vmem %s0, 2
    %v84 = vld [vmem:[%s83] sm:$0x1]
    %85 = vrot.lane.b32.xlu0 %v84, 4
    %v86 = vpop.permute.xlu0 %85
    %vm87 = vcmask 48160
    %88 = vst.msk [vmem:[#allocation0] sm:$0x1] %vm87, %v86
    %s89 = scalar_lea.vmem %s0, 1
    %v90 = vld [vmem:[%s89] sm:$0x1]
    %91 = vrot.lane.b32.xlu0 %v90, 2
    %v92 = vpop.permute.xlu0 %91
    %vm93 = vcmask 31760
    %94 = vst.msk [vmem:[#allocation0] sm:$0x1] %vm93, %v92
    %s96 = sshll.u32 1, 1
    %s97 = ssub.s32 %s96, 1
    %v99 = vld [vmem:[#allocation0] sm:%s97]
    %s100 = sshll.u32 1, 1
    %s101 = ssub.s32 %s100, 1
    %102 = vst [vmem:[%s1] sm:%s101] %v99

// kernel: tile.23
$region0: #{tile.23}
  #allocation0 [shape = 's32[1]{0}', space=sflag, size = 0x4, scoped, tag = 'scoped memory for tile.23']
  %s0 = inlined_call_operand.vmem [shape: f32[8], index: 0, kind: input, shape index: {}]
  %s1 = inlined_call_operand.vmem [shape: f32[16,8], index: 1, kind: output, shape index: {}]
  // Predicated region
  $region2: #{tile.23} parent=0 // pred_check
    _
  $region3: #{tile.23} parent=0 // pred_check_branch
    %3 = sbr.rel (0) target = $region5
  $region4: #{tile.23} parent=0 // pred_region
    _
  $region5: #{tile.23} parent=0 // pred_fallthru
    _
  %v4 = vld [vmem:[%s0] ss:$0 sm:$0xff]
  %5 = vst [vmem:[%s1] sm:$0xff] %v4
  %s6 = scalar_lea.vmem %s1, 8
  %7 = vst [vmem:[%s6] sm:$0xff] %v4

// kernel: tile.24
$region0: #{tile.24}
  %s0 = inlined_call_operand.vmem [shape: f32[16,8], index: 0, kind: input, shape index: {}]
  %s1 = inlined_call_operand.vmem [shape: f32[1,128], index: 1, kind: output, shape index: {}]
  $region1: #{tile.24} parent=0
    #allocation0 [shape = 'u8[4096]{0}', space=vmem, size = 0x1000, scoped, tag = 'scoped mem for output reshape']
    %v2 = vld [vmem:[%s0] sm:$0x1]
    %vm3 = vcmask 64512
    %4 = vst.msk [vmem:[#allocation0] sm:$0x1] %vm3, %v2
    %s5 = scalar_lea.vmem %s0, 15
    %v6 = vld [vmem:[%s5] sm:$0x1]
    %7 = vrot.lane.b32.xlu0 %v6, 120
    %v8 = vpop.permute.xlu0 %7
    %vm9 = vcmask 1048512
    %10 = vst.msk [vmem:[#allocation0] sm:$0x1] %vm9, %v8
    %s11 = scalar_lea.vmem %s0, 14
    %v12 = vld [vmem:[%s11] sm:$0x1]
    %13 = vrot.lane.b32.xlu0 %v12, 112
    %v14 = vpop.permute.xlu0 %13
    %vm15 = vcmask 982912
    %16 = vst.msk [vmem:[#allocation0] sm:$0x1] %vm15, %v14
    %s17 = scalar_lea.vmem %s0, 13
    %v18 = vld [vmem:[%s17] sm:$0x1]
    %19 = vrot.lane.b32.xlu0 %v18, 104
    %v20 = vpop.permute.xlu0 %19
    %vm21 = vcmask 917312
    %22 = vst.msk [vmem:[#allocation0] sm:$0x1] %vm21, %v20
    %s23 = scalar_lea.vmem %s0, 12
    %v24 = vld [vmem:[%s23] sm:$0x1]
    %25 = vrot.lane.b32.xlu0 %v24, 96
    %v26 = vpop.permute.xlu0 %25
    %vm27 = vcmask 851712
    %28 = vst.msk [vmem:[#allocation0] sm:$0x1] %vm27, %v26
    %s29 = scalar_lea.vmem %s0, 11
    %v30 = vld [vmem:[%s29] sm:$0x1]
    %31 = vrot.lane.b32.xlu0 %v30, 88
    %v32 = vpop.permute.xlu0 %31
    %vm33 = vcmask 786112
    %34 = vst.msk [vmem:[#allocation0] sm:$0x1] %vm33, %v32
    %s35 = scalar_lea.vmem %s0, 10
    %v36 = vld [vmem:[%s35] sm:$0x1]
    %37 = vrot.lane.b32.xlu0 %v36, 80
    %v38 = vpop.permute.xlu0 %37
    %vm39 = vcmask 720512
    %40 = vst.msk [vmem:[#allocation0] sm:$0x1] %vm39, %v38
    %s41 = scalar_lea.vmem %s0, 9
    %v42 = vld [vmem:[%s41] sm:$0x1]
    %43 = vrot.lane.b32.xlu0 %v42, 72
    %v44 = vpop.permute.xlu0 %43
    %vm45 = vcmask 654912
    %46 = vst.msk [vmem:[#allocation0] sm:$0x1] %vm45, %v44
    %s47 = scalar_lea.vmem %s0, 8
    %v48 = vld [vmem:[%s47] sm:$0x1]
    %49 = vrot.lane.b32.xlu0 %v48, 64
    %v50 = vpop.permute.xlu0 %49
    %vm51 = vcmask 589312
    %52 = vst.msk [vmem:[#allocation0] sm:$0x1] %vm51, %v50
    %s53 = scalar_lea.vmem %s0, 7
    %v54 = vld [vmem:[%s53] sm:$0x1]
    %55 = vrot.lane.b32.xlu0 %v54, 56
    %v56 = vpop.permute.xlu0 %55
    %vm57 = vcmask 523712
    %58 = vst.msk [vmem:[#allocation0] sm:$0x1] %vm57, %v56
    %s59 = scalar_lea.vmem %s0, 6
    %v60 = vld [vmem:[%s59] sm:$0x1]
    %61 = vrot.lane.b32.xlu0 %v60, 48
    %v62 = vpop.permute.xlu0 %61
    %vm63 = vcmask 458112
    %64 = vst.msk [vmem:[#allocation0] sm:$0x1] %vm63, %v62
    %s65 = scalar_lea.vmem %s0, 5
    %v66 = vld [vmem:[%s65] sm:$0x1]
    %67 = vrot.lane.b32.xlu0 %v66, 40
    %v68 = vpop.permute.xlu0 %67
    %vm69 = vcmask 392512
    %70 = vst.msk [vmem:[#allocation0] sm:$0x1] %vm69, %v68
    %s71 = scalar_lea.vmem %s0, 4
    %v72 = vld [vmem:[%s71] sm:$0x1]
    %73 = vrot.lane.b32.xlu0 %v72, 32
    %v74 = vpop.permute.xlu0 %73
    %vm75 = vcmask 326912
    %76 = vst.msk [vmem:[#allocation0] sm:$0x1] %vm75, %v74
    %s77 = scalar_lea.vmem %s0, 3
    %v78 = vld [vmem:[%s77] sm:$0x1]
    %79 = vrot.lane.b32.xlu0 %v78, 24
    %v80 = vpop.permute.xlu0 %79
    %vm81 = vcmask 261312
    %82 = vst.msk [vmem:[#allocation0] sm:$0x1] %vm81, %v80
    %s83 = scalar_lea.vmem %s0, 2
    %v84 = vld [vmem:[%s83] sm:$0x1]
    %85 = vrot.lane.b32.xlu0 %v84, 16
    %v86 = vpop.permute.xlu0 %85
    %vm87 = vcmask 195712
    %88 = vst.msk [vmem:[#allocation0] sm:$0x1] %vm87, %v86
    %s89 = scalar_lea.vmem %s0, 1
    %v90 = vld [vmem:[%s89] sm:$0x1]
    %91 = vrot.lane.b32.xlu0 %v90, 8
    %v92 = vpop.permute.xlu0 %91
    %vm93 = vcmask 130112
    %94 = vst.msk [vmem:[#allocation0] sm:$0x1] %vm93, %v92
    %s96 = sshll.u32 1, 1
    %s97 = ssub.s32 %s96, 1
    %v99 = vld [vmem:[#allocation0] sm:%s97]
    %s100 = sshll.u32 1, 1
    %s101 = ssub.s32 %s100, 1
    %102 = vst [vmem:[%s1] sm:%s101] %v99

// kernel: reslayer_forward.1
$region0: #{reslayer_forward.1}
  #allocation0 [shape = 'u32[]', space=smem, size = 0x4, offset = 0x4, fixed_abs, tag = 'smem constant byte address 0x4 - core index']
  #allocation1 [shape = 'u32[144,128]{1,0:T(1,128)}', space=vmem, size = 0x12000, scoped, tag = 'internal scratch']
  %s0 = inlined_call_operand.vmem [shape: f32[32,128], index: 0, kind: input, shape index: {}]
  %s1 = inlined_call_operand.vmem [shape: bf16[3,128,32], index: 1, kind: input, shape index: {}]
  %s2 = inlined_call_operand.vmem [shape: f32[1,32], index: 2, kind: input, shape index: {}]
  %s3 = inlined_call_operand.vmem [shape: bf16[3,32,128], index: 3, kind: input, shape index: {}]
  %s4 = inlined_call_operand.vmem [shape: f32[1,128], index: 4, kind: input, shape index: {}]
  %s5 = inlined_call_operand.vmem [shape: bf16[3,128,128], index: 5, kind: input, shape index: {}]
  %s6 = inlined_call_operand.vmem [shape: f32[1,128], index: 6, kind: input, shape index: {}]
  %s7 = inlined_call_operand.vmem [shape: f32[32,128], index: 7, kind: output, shape index: {}]
  %s8 = sld [smem:[#allocation0]]
  $region38: #{reslayer_forward.1} parent=0
    _
  %s10 = ssub.s32 1, %s8
  %s11 = scalar_select 0, %s10, %s8
  // Predicated region
  $region2: #{reslayer_forward.1} parent=0 // pred_check
    _
  $region3: #{reslayer_forward.1} parent=0 // pred_check_branch
    %13 = sbr.rel (0) target = $region5
  $region4: #{reslayer_forward.1} parent=0 // pred_region
    _
  $region5: #{reslayer_forward.1} parent=0 // pred_fallthru
    _
  // Predicated region
  $region6: #{reslayer_forward.1} parent=0 // pred_check
    _
  $region7: #{reslayer_forward.1} parent=0 // pred_check_branch
    %15 = sbr.rel (0) target = $region9
  $region8: #{reslayer_forward.1} parent=0 // pred_region
    _
  $region9: #{reslayer_forward.1} parent=0 // pred_fallthru
    _
  // Predicated region
  $region10: #{reslayer_forward.1} parent=0 // pred_check
    _
  $region11: #{reslayer_forward.1} parent=0 // pred_check_branch
    %17 = sbr.rel (0) target = $region13
  $region12: #{reslayer_forward.1} parent=0 // pred_region
    _
  $region13: #{reslayer_forward.1} parent=0 // pred_fallthru
    _
  // Predicated region
  $region14: #{reslayer_forward.1} parent=0 // pred_check
    _
  $region15: #{reslayer_forward.1} parent=0 // pred_check_branch
    %19 = sbr.rel (0) target = $region17
  $region16: #{reslayer_forward.1} parent=0 // pred_region
    _
  $region17: #{reslayer_forward.1} parent=0 // pred_fallthru
    _
  // Predicated region
  $region18: #{reslayer_forward.1} parent=0 // pred_check
    _
  $region19: #{reslayer_forward.1} parent=0 // pred_check_branch
    %21 = sbr.rel (0) target = $region21
  $region20: #{reslayer_forward.1} parent=0 // pred_region
    _
  $region21: #{reslayer_forward.1} parent=0 // pred_fallthru
    _
  // Predicated region
  $region22: #{reslayer_forward.1} parent=0 // pred_check
    _
  $region23: #{reslayer_forward.1} parent=0 // pred_check_branch
    %23 = sbr.rel (0) target = $region25
  $region24: #{reslayer_forward.1} parent=0 // pred_region
    _
  $region25: #{reslayer_forward.1} parent=0 // pred_fallthru
    _
  // Predicated region
  $region26: #{reslayer_forward.1} parent=0 // pred_check
    _
  $region27: #{reslayer_forward.1} parent=0 // pred_check_branch
    %25 = sbr.rel (0) target = $region29
  $region28: #{reslayer_forward.1} parent=0 // pred_region
    _
  $region29: #{reslayer_forward.1} parent=0 // pred_fallthru
    _
  %v27 = vld [vmem:[%s0] sm:$0xff]
  %v28 = vld [vmem:[%s0 + $0x8] sm:$0xff]
  %v29 = vld [vmem:[%s0 + $0x10] sm:$0xff]
  %v30 = vld [vmem:[%s0 + $0x18] sm:$0xff]
  %v31 = vlaneseq
  %v32 = vshrl.u32 %v31, 7
  %v33 = vadd.s32 %v32, 8
  %v34 = vadd.s32 %v32, 16
  %v35 = vadd.s32 %v32, 24
  %vm36 = vcmp.lt.s32.totalorder %v32, 0
  %v37 = vsub.s32 0, %v32
  %v38 = vsel %vm36, %v37, %v32
  %v39 = vshrl.u32 %v38, 4
  %v40 = vand.u32 %v38, 15
  %v41 = vsub.s32 0, %v40
  %v42 = vsel %vm36, %v41, %v40
  %vm43 = vcmp.lt.s32.totalorder %v33, 0
  %v44 = vsub.s32 0, %v33
  %v45 = vsel %vm43, %v44, %v33
  %v46 = vshrl.u32 %v45, 4
  %v47 = vand.u32 %v45, 15
  %v48 = vsub.s32 0, %v47
  %v49 = vsel %vm43, %v48, %v47
  %vm50 = vcmp.lt.s32.totalorder %v34, 0
  %v51 = vsub.s32 0, %v34
  %v52 = vsel %vm50, %v51, %v34
  %v53 = vshrl.u32 %v52, 4
  %v54 = vand.u32 %v52, 15
  %v55 = vsub.s32 0, %v54
  %v56 = vsel %vm50, %v55, %v54
  %vm57 = vcmp.lt.s32.totalorder %v35, 0
  %v58 = vsub.s32 0, %v35
  %v59 = vsel %vm57, %v58, %v35
  %v60 = vshrl.u32 %v59, 4
  %v61 = vand.u32 %v59, 15
  %v62 = vsub.s32 0, %v61
  %v63 = vsel %vm57, %v62, %v61
  %vm64 = vcmp.ne.s32.totalorder %v42, 0
  %vm65 = vcmp.ne.s32.totalorder %v49, 0
  %vm66 = vcmp.ne.s32.totalorder %v56, 0
  %vm67 = vcmp.ne.s32.totalorder %v63, 0
  %vm68 = vcmp.lt.s32.totalorder %v42, 0
  %vm69 = vcmp.lt.s32.totalorder %v49, 0
  %vm70 = vcmp.lt.s32.totalorder %v56, 0
  %vm71 = vcmp.lt.s32.totalorder %v63, 0
  %vm72 = vmand %vm68, %vm64
  %vm73 = vmand %vm69, %vm65
  %vm74 = vmand %vm70, %vm66
  %vm75 = vmand %vm71, %vm67
  %v76 = vadd.s32 %v42, 16
  %v77 = vadd.s32 %v49, 16
  %v78 = vadd.s32 %v56, 16
  %v79 = vadd.s32 %v63, 16
  %v80 = vsel %vm72, %v76, %v42
  %v81 = vsel %vm73, %v77, %v49
  %v82 = vsel %vm74, %v78, %v56
  %v83 = vsel %vm75, %v79, %v63
  %vm84 = vcmp.ne.s32.totalorder %v80, 0
  %vm85 = vcmp.ne.s32.totalorder %v81, 0
  %vm86 = vcmp.ne.s32.totalorder %v82, 0
  %vm87 = vcmp.ne.s32.totalorder %v83, 0
  %v88 = vsel %vm84, 1, 0
  %v89 = vsel %vm85, 1, 0
  %v90 = vsel %vm86, 1, 0
  %v91 = vsel %vm87, 1, 0
  %v92 = vcvt.s32.f32 %v88
  %v93 = vcvt.s32.f32 %v89
  %v94 = vcvt.s32.f32 %v90
  %v95 = vcvt.s32.f32 %v91
  %vm96 = vcmp.ne.s32.totalorder %v80, 15
  %vm97 = vcmp.ne.s32.totalorder %v81, 15
  %vm98 = vcmp.ne.s32.totalorder %v82, 15
  %vm99 = vcmp.ne.s32.totalorder %v83, 15
  %v100 = vsel %vm96, 1, 0
  %v101 = vsel %vm97, 1, 0
  %v102 = vsel %vm98, 1, 0
  %v103 = vsel %vm99, 1, 0
  %v104 = vcvt.s32.f32 %v100
  %v105 = vcvt.s32.f32 %v101
  %v106 = vcvt.s32.f32 %v102
  %v107 = vcvt.s32.f32 %v103
  %v108 = vpack.c.bf16 %v28, %v27
  %v109 = vpack.c.bf16 %v30, %v29
  %v110 = vld [vmem:[%s1] sm:$0xf]
  %v111 = vld [vmem:[%s1 + $0x4] sm:$0xf]
  %v112 = vld [vmem:[%s1 + $0x8] sm:$0xf]
  %v113 = vld [vmem:[%s1 + $0xc] sm:$0xf]
  %v114 = vld [vmem:[%s1 + $0x10] sm:$0xf]
  %v115 = vld [vmem:[%s1 + $0x14] sm:$0xf]
  %v116 = vld [vmem:[%s1 + $0x18] sm:$0xf]
  %v117 = vld [vmem:[%s1 + $0x1c] sm:$0xf]
  %v118 = vld [vmem:[%s1 + $0x20] sm:$0xf]
  %v119 = vld [vmem:[%s1 + $0x24] sm:$0xf]
  %v120 = vld [vmem:[%s1 + $0x28] sm:$0xf]
  %v121 = vld [vmem:[%s1 + $0x2c] sm:$0xf]
  %v122 = vld [vmem:[%s1 + $0x30] sm:$0xf]
  %v123 = vld [vmem:[%s1 + $0x34] sm:$0xf]
  %v124 = vld [vmem:[%s1 + $0x38] sm:$0xf]
  %v125 = vld [vmem:[%s1 + $0x3c] sm:$0xf]
  %v142 = vunpack.c.l.b16 %v110
  %v143 = vunpack.c.l.b16 %v111
  %v144 = vunpack.c.l.b16 %v112
  %v145 = vunpack.c.l.b16 %v113
  %v146 = vunpack.c.l.b16 %v114
  %v147 = vunpack.c.l.b16 %v115
  %v148 = vunpack.c.l.b16 %v116
  %v149 = vunpack.c.l.b16 %v117
  %v150 = vunpack.c.l.b16 %v118
  %v151 = vunpack.c.l.b16 %v119
  %v152 = vunpack.c.l.b16 %v120
  %v153 = vunpack.c.l.b16 %v121
  %v154 = vunpack.c.l.b16 %v122
  %v155 = vunpack.c.l.b16 %v123
  %v156 = vunpack.c.l.b16 %v124
  %v157 = vunpack.c.l.b16 %v125
  %v158 = vpack.c.b16 %v143, %v142
  %v159 = vpack.c.b16 %v145, %v144
  %v160 = vpack.c.b16 %v147, %v146
  %v161 = vpack.c.b16 %v149, %v148
  %v162 = vpack.c.b16 %v151, %v150
  %v163 = vpack.c.b16 %v153, %v152
  %v164 = vpack.c.b16 %v155, %v154
  %v165 = vpack.c.b16 %v157, %v156
  %174 = vmatprep.subr.bf16.mxu0 0
  %175 = vmatpush1.bf16.msra.mxu0 %v165
  %176 = vmatprep.subr.bf16.mxu0 0
  %177 = vmatpush1.bf16.msra.mxu0 %v164
  %178 = vmatprep.subr.bf16.mxu0 0
  %179 = vmatpush1.bf16.msra.mxu0 %v163
  %180 = vmatprep.subr.bf16.mxu0 0
  %181 = vmatpush1.bf16.msra.mxu0 %v162
  %182 = vmatprep.subr.bf16.mxu0 0
  %183 = vmatpush1.bf16.msra.mxu0 %v161
  %184 = vmatprep.subr.bf16.mxu0 0
  %185 = vmatpush1.bf16.msra.mxu0 %v160
  %186 = vmatprep.subr.bf16.mxu0 0
  %187 = vmatpush1.bf16.msra.mxu0 %v159
  %188 = vmatprep.subr.bf16.mxu0 0
  %189 = vmatpush1.bf16.msra.mxu0 %v158
  %190 = vmatprep.subr.bf16.mxu0 0
  %191 = vmatpush2.bf16.msra.mxu0 0
  %192 = vmatprep.subr.bf16.mxu0 0
  %193 = vmatpush2.bf16.msra.mxu0 0
  %194 = vmatprep.subr.bf16.mxu0 0
  %195 = vmatpush2.bf16.msra.mxu0 0
  %196 = vmatprep.subr.bf16.mxu0 0
  %197 = vmatpush2.bf16.msra.mxu0 0
  %198 = vmatprep.subr.bf16.mxu0 0
  %199 = vmatpush2.bf16.msra.mxu0 0
  %200 = vmatprep.subr.bf16.mxu0 0
  %201 = vmatpush2.bf16.msra.mxu0 0
  %202 = vmatprep.subr.bf16.mxu0 0
  %203 = vmatpush2.bf16.msra.mxu0 0
  %204 = vmatprep.subr.bf16.mxu0 0
  %205 = vmatpush2.bf16.msra.mxu0 0
  %206 = vmatprep.mubr.bf16.mxu0 0
  %207 = vmatmul.mubr.bf16.gmra.mxu0 %v108
  %v208 = vpop.f32.mrf.mxu0
  %v209 = vadd.f32 0.0, %v208
  %v210 = vpop.f32.mrf.mxu0
  %v211 = vpop.f32.mrf.mxu0
  %v212 = vadd.f32 0.0, %v211
  %v213 = vpop.f32.mrf.mxu0
  %214 = vmatprep.mubr.bf16.mxu0 0
  %215 = vmatmul.mubr.bf16.gmra.mxu0 %v109
  %v216 = vpop.f32.mrf.mxu0
  %v217 = vadd.f32 0.0, %v216
  %v218 = vpop.f32.mrf.mxu0
  %v219 = vpop.f32.mrf.mxu0
  %v220 = vadd.f32 0.0, %v219
  %v221 = vpop.f32.mrf.mxu0
  %222 = vdwg.mxu0
  %s223 = scalar_lea.vmem %s1, 64
  %v224 = vld [vmem:[%s223] sm:$0xf]
  %v225 = vld [vmem:[%s223 + $0x4] sm:$0xf]
  %v226 = vld [vmem:[%s223 + $0x8] sm:$0xf]
  %v227 = vld [vmem:[%s223 + $0xc] sm:$0xf]
  %v228 = vld [vmem:[%s223 + $0x10] sm:$0xf]
  %v229 = vld [vmem:[%s223 + $0x14] sm:$0xf]
  %v230 = vld [vmem:[%s223 + $0x18] sm:$0xf]
  %v231 = vld [vmem:[%s223 + $0x1c] sm:$0xf]
  %v232 = vld [vmem:[%s223 + $0x20] sm:$0xf]
  %v233 = vld [vmem:[%s223 + $0x24] sm:$0xf]
  %v234 = vld [vmem:[%s223 + $0x28] sm:$0xf]
  %v235 = vld [vmem:[%s223 + $0x2c] sm:$0xf]
  %v236 = vld [vmem:[%s223 + $0x30] sm:$0xf]
  %v237 = vld [vmem:[%s223 + $0x34] sm:$0xf]
  %v238 = vld [vmem:[%s223 + $0x38] sm:$0xf]
  %v239 = vld [vmem:[%s223 + $0x3c] sm:$0xf]
  %s240 = scalar_lea.vmem %s1, 128
  %v241 = vld [vmem:[%s240] sm:$0xf]
  %v242 = vld [vmem:[%s240 + $0x4] sm:$0xf]
  %v243 = vld [vmem:[%s240 + $0x8] sm:$0xf]
  %v244 = vld [vmem:[%s240 + $0xc] sm:$0xf]
  %v245 = vld [vmem:[%s240 + $0x10] sm:$0xf]
  %v246 = vld [vmem:[%s240 + $0x14] sm:$0xf]
  %v247 = vld [vmem:[%s240 + $0x18] sm:$0xf]
  %v248 = vld [vmem:[%s240 + $0x1c] sm:$0xf]
  %v249 = vld [vmem:[%s240 + $0x20] sm:$0xf]
  %v250 = vld [vmem:[%s240 + $0x24] sm:$0xf]
  %v251 = vld [vmem:[%s240 + $0x28] sm:$0xf]
  %v252 = vld [vmem:[%s240 + $0x2c] sm:$0xf]
  %v253 = vld [vmem:[%s240 + $0x30] sm:$0xf]
  %v254 = vld [vmem:[%s240 + $0x34] sm:$0xf]
  %v255 = vld [vmem:[%s240 + $0x38] sm:$0xf]
  %v256 = vld [vmem:[%s240 + $0x3c] sm:$0xf]
  %v273 = vunpack.c.l.b16 %v241
  %v274 = vunpack.c.l.b16 %v242
  %v275 = vunpack.c.l.b16 %v243
  %v276 = vunpack.c.l.b16 %v244
  %v277 = vunpack.c.l.b16 %v245
  %v278 = vunpack.c.l.b16 %v246
  %v279 = vunpack.c.l.b16 %v247
  %v280 = vunpack.c.l.b16 %v248
  %v281 = vunpack.c.l.b16 %v249
  %v282 = vunpack.c.l.b16 %v250
  %v283 = vunpack.c.l.b16 %v251
  %v284 = vunpack.c.l.b16 %v252
  %v285 = vunpack.c.l.b16 %v253
  %v286 = vunpack.c.l.b16 %v254
  %v287 = vunpack.c.l.b16 %v255
  %v288 = vunpack.c.l.b16 %v256
  %v289 = vpack.c.b16 %v274, %v273
  %v290 = vpack.c.b16 %v276, %v275
  %v291 = vpack.c.b16 %v278, %v277
  %v292 = vpack.c.b16 %v280, %v279
  %v293 = vpack.c.b16 %v282, %v281
  %v294 = vpack.c.b16 %v284, %v283
  %v295 = vpack.c.b16 %v286, %v285
  %v296 = vpack.c.b16 %v288, %v287
  %305 = vmatprep.subr.bf16.mxu0 0
  %306 = vmatpush1.bf16.msra.mxu0 %v296
  %307 = vmatprep.subr.bf16.mxu0 0
  %308 = vmatpush1.bf16.msra.mxu0 %v295
  %309 = vmatprep.subr.bf16.mxu0 0
  %310 = vmatpush1.bf16.msra.mxu0 %v294
  %311 = vmatprep.subr.bf16.mxu0 0
  %312 = vmatpush1.bf16.msra.mxu0 %v293
  %313 = vmatprep.subr.bf16.mxu0 0
  %314 = vmatpush1.bf16.msra.mxu0 %v292
  %315 = vmatprep.subr.bf16.mxu0 0
  %316 = vmatpush1.bf16.msra.mxu0 %v291
  %317 = vmatprep.subr.bf16.mxu0 0
  %318 = vmatpush1.bf16.msra.mxu0 %v290
  %319 = vmatprep.subr.bf16.mxu0 0
  %320 = vmatpush1.bf16.msra.mxu0 %v289
  %321 = vmatprep.subr.bf16.mxu0 0
  %322 = vmatpush2.bf16.msra.mxu0 0
  %323 = vmatprep.subr.bf16.mxu0 0
  %324 = vmatpush2.bf16.msra.mxu0 0
  %325 = vmatprep.subr.bf16.mxu0 0
  %326 = vmatpush2.bf16.msra.mxu0 0
  %327 = vmatprep.subr.bf16.mxu0 0
  %328 = vmatpush2.bf16.msra.mxu0 0
  %329 = vmatprep.subr.bf16.mxu0 0
  %330 = vmatpush2.bf16.msra.mxu0 0
  %331 = vmatprep.subr.bf16.mxu0 0
  %332 = vmatpush2.bf16.msra.mxu0 0
  %333 = vmatprep.subr.bf16.mxu0 0
  %334 = vmatpush2.bf16.msra.mxu0 0
  %335 = vmatprep.subr.bf16.mxu0 0
  %336 = vmatpush2.bf16.msra.mxu0 0
  %337 = vmatprep.mubr.bf16.mxu0 0
  %338 = vmatmul.mubr.bf16.gmra.mxu0 %v108
  %v339 = vpop.f32.mrf.mxu0
  %v340 = vadd.f32 0.0, %v339
  %v341 = vpop.f32.mrf.mxu0
  %v342 = vpop.f32.mrf.mxu0
  %v343 = vadd.f32 0.0, %v342
  %v344 = vpop.f32.mrf.mxu0
  %345 = vmatprep.mubr.bf16.mxu0 0
  %346 = vmatmul.mubr.bf16.gmra.mxu0 %v109
  %v347 = vpop.f32.mrf.mxu0
  %v348 = vadd.f32 0.0, %v347
  %v349 = vpop.f32.mrf.mxu0
  %v350 = vpop.f32.mrf.mxu0
  %v351 = vadd.f32 0.0, %v350
  %v352 = vpop.f32.mrf.mxu0
  %353 = vdwg.mxu0
  %v354 = vld [vmem:[%s2] sm:$0x1]
  %v356 = vlaneseq
  %v357 = vshrl.u32 %v356, 7
  %v358 = vsub.s32 0, %v357
  %v359 = vrot.slane %v354, %v358
  %v377 = vunpack.c.l.b16 %v224
  %v378 = vunpack.c.l.b16 %v225
  %v379 = vunpack.c.l.b16 %v226
  %v380 = vunpack.c.l.b16 %v227
  %v381 = vunpack.c.l.b16 %v228
  %v382 = vunpack.c.l.b16 %v229
  %v383 = vunpack.c.l.b16 %v230
  %v384 = vunpack.c.l.b16 %v231
  %v385 = vunpack.c.l.b16 %v232
  %v386 = vunpack.c.l.b16 %v233
  %v387 = vunpack.c.l.b16 %v234
  %v388 = vunpack.c.l.b16 %v235
  %v389 = vunpack.c.l.b16 %v236
  %v390 = vunpack.c.l.b16 %v237
  %v391 = vunpack.c.l.b16 %v238
  %v392 = vunpack.c.l.b16 %v239
  %v393 = vpack.c.b16 %v378, %v377
  %v394 = vpack.c.b16 %v380, %v379
  %v395 = vpack.c.b16 %v382, %v381
  %v396 = vpack.c.b16 %v384, %v383
  %v397 = vpack.c.b16 %v386, %v385
  %v398 = vpack.c.b16 %v388, %v387
  %v399 = vpack.c.b16 %v390, %v389
  %v400 = vpack.c.b16 %v392, %v391
  %409 = vmatprep.subr.bf16.mxu0 0
  %410 = vmatpush1.bf16.msra.mxu0 %v400
  %411 = vmatprep.subr.bf16.mxu0 0
  %412 = vmatpush1.bf16.msra.mxu0 %v399
  %413 = vmatprep.subr.bf16.mxu0 0
  %414 = vmatpush1.bf16.msra.mxu0 %v398
  %415 = vmatprep.subr.bf16.mxu0 0
  %416 = vmatpush1.bf16.msra.mxu0 %v397
  %417 = vmatprep.subr.bf16.mxu0 0
  %418 = vmatpush1.bf16.msra.mxu0 %v396
  %419 = vmatprep.subr.bf16.mxu0 0
  %420 = vmatpush1.bf16.msra.mxu0 %v395
  %421 = vmatprep.subr.bf16.mxu0 0
  %422 = vmatpush1.bf16.msra.mxu0 %v394
  %423 = vmatprep.subr.bf16.mxu0 0
  %424 = vmatpush1.bf16.msra.mxu0 %v393
  %425 = vmatprep.subr.bf16.mxu0 0
  %426 = vmatpush2.bf16.msra.mxu0 0
  %427 = vmatprep.subr.bf16.mxu0 0
  %428 = vmatpush2.bf16.msra.mxu0 0
  %429 = vmatprep.subr.bf16.mxu0 0
  %430 = vmatpush2.bf16.msra.mxu0 0
  %431 = vmatprep.subr.bf16.mxu0 0
  %432 = vmatpush2.bf16.msra.mxu0 0
  %433 = vmatprep.subr.bf16.mxu0 0
  %434 = vmatpush2.bf16.msra.mxu0 0
  %435 = vmatprep.subr.bf16.mxu0 0
  %436 = vmatpush2.bf16.msra.mxu0 0
  %437 = vmatprep.subr.bf16.mxu0 0
  %438 = vmatpush2.bf16.msra.mxu0 0
  %439 = vmatprep.subr.bf16.mxu0 0
  %440 = vmatpush2.bf16.msra.mxu0 0
  %441 = vmatprep.mubr.bf16.mxu0 0
  %442 = vmatmul.mubr.bf16.gmra.mxu0 %v108
  %v443 = vpop.f32.mrf.mxu0
  %v444 = vadd.f32 %v359, %v443
  %v445 = vpop.f32.mrf.mxu0
  %v446 = vpop.f32.mrf.mxu0
  %v447 = vadd.f32 %v359, %v446
  %v448 = vpop.f32.mrf.mxu0
  %449 = vmatprep.mubr.bf16.mxu0 0
  %450 = vmatmul.mubr.bf16.gmra.mxu0 %v109
  %v451 = vpop.f32.mrf.mxu0
  %v452 = vadd.f32 %v359, %v451
  %v453 = vpop.f32.mrf.mxu0
  %v454 = vpop.f32.mrf.mxu0
  %v455 = vadd.f32 %v359, %v454
  %v456 = vpop.f32.mrf.mxu0
  %457 = vdwg.mxu0
  %v458 = vrot.slane %v209, 7
  %v459 = vrot.slane %v212, 7
  %v460 = vrot.slane %v217, 7
  %v461 = vrot.slane %v220, 7
  %vm462 = vcmp.lt.s32.totalorder %v32, 1
  %v463 = vsel %vm462, %v460, %v461
  %v464 = vsel %vm462, %v459, %v460
  %v465 = vsel %vm462, %v458, %v459
  %v466 = vsel %vm462, %v461, %v458
  %v467 = vmul.f32 %v466, %v92
  %v468 = vmul.f32 %v465, %v93
  %v469 = vmul.f32 %v464, %v94
  %v470 = vmul.f32 %v463, %v95
  %v471 = vadd.f32 %v444, %v467
  %v472 = vadd.f32 %v447, %v468
  %v473 = vadd.f32 %v452, %v469
  %v474 = vadd.f32 %v455, %v470
  %v475 = vrot.slane %v340, 1
  %v476 = vrot.slane %v343, 1
  %v477 = vrot.slane %v348, 1
  %v478 = vrot.slane %v351, 1
  %vm479 = vcmp.lt.s32.totalorder %v32, 7
  %v480 = vsel %vm479, %v477, %v478
  %v481 = vsel %vm479, %v476, %v477
  %v482 = vsel %vm479, %v475, %v476
  %v483 = vsel %vm479, %v478, %v475
  %v484 = vmul.f32 %v482, %v104
  %v485 = vmul.f32 %v481, %v105
  %v486 = vmul.f32 %v480, %v106
  %v487 = vmul.f32 %v483, %v107
  %v488 = vadd.f32 %v471, %v484
  %v489 = vadd.f32 %v472, %v485
  %v490 = vadd.f32 %v473, %v486
  %v491 = vadd.f32 %v474, %v487
  %v492 = vmax.f32 %v488, 0.0
  %v493 = vmax.f32 %v489, 0.0
  %v494 = vmax.f32 %v490, 0.0
  %v495 = vmax.f32 %v491, 0.0
  %v496 = vpack.c.bf16 %v493, %v492
  %v497 = vpack.c.bf16 %v495, %v494
  %v498 = vld [vmem:[%s3] sm:$0xf]
  %v499 = vld [vmem:[%s3 + $0x4] sm:$0xf]
  %v500 = vld [vmem:[%s3 + $0x8] sm:$0xf]
  %v501 = vld [vmem:[%s3 + $0xc] sm:$0xf]
  %v506 = vunpack.c.l.b16 %v498
  %v507 = vunpack.c.l.b16 %v499
  %v508 = vunpack.c.l.b16 %v500
  %v509 = vunpack.c.l.b16 %v501
  %v510 = vpack.c.b16 %v507, %v506
  %v511 = vpack.c.b16 %v509, %v508
  %vm514 = vcmask 261120
  %v516 = vsel %vm514, %v496, 0
  %v519 = vsel %vm514, %v497, 0
  %521 = vmatprep.subr.bf16.mxu0 0
  %522 = vmatpush1.bf16.msra.mxu0 0
  %523 = vmatprep.subr.bf16.mxu0 0
  %524 = vmatpush1.bf16.msra.mxu0 0
  %525 = vmatprep.subr.bf16.mxu0 0
  %526 = vmatpush1.bf16.msra.mxu0 0
  %527 = vmatprep.subr.bf16.mxu0 0
  %528 = vmatpush1.bf16.msra.mxu0 0
  %529 = vmatprep.subr.bf16.mxu0 0
  %530 = vmatpush1.bf16.msra.mxu0 0
  %531 = vmatprep.subr.bf16.mxu0 0
  %532 = vmatpush1.bf16.msra.mxu0 0
  %533 = vmatprep.subr.bf16.mxu0 0
  %534 = vmatpush1.bf16.msra.mxu0 %v511
  %535 = vmatprep.subr.bf16.mxu0 0
  %536 = vmatpush1.bf16.msra.mxu0 %v510
  %537 = vmatprep.subr.bf16.mxu0 0
  %538 = vmatpush2.bf16.msra.mxu0 0
  %539 = vmatprep.subr.bf16.mxu0 0
  %540 = vmatpush2.bf16.msra.mxu0 0
  %541 = vmatprep.subr.bf16.mxu0 0
  %542 = vmatpush2.bf16.msra.mxu0 0
  %543 = vmatprep.subr.bf16.mxu0 0
  %544 = vmatpush2.bf16.msra.mxu0 0
  %545 = vmatprep.subr.bf16.mxu0 0
  %546 = vmatpush2.bf16.msra.mxu0 0
  %547 = vmatprep.subr.bf16.mxu0 0
  %548 = vmatpush2.bf16.msra.mxu0 0
  %549 = vmatprep.subr.bf16.mxu0 0
  %550 = vmatpush2.bf16.msra.mxu0 0
  %551 = vmatprep.subr.bf16.mxu0 0
  %552 = vmatpush2.bf16.msra.mxu0 0
  %553 = vmatprep.mubr.bf16.mxu0 0
  %554 = vmatmul.mubr.bf16.gmra.mxu0 %v516
  %v555 = vpop.f32.mrf.mxu0
  %v556 = vadd.f32 0.0, %v555
  %v557 = vpop.f32.mrf.mxu0
  %v558 = vpop.f32.mrf.mxu0
  %v559 = vadd.f32 0.0, %v558
  %v560 = vpop.f32.mrf.mxu0
  %561 = vmatprep.mubr.bf16.mxu0 0
  %562 = vmatmul.mubr.bf16.gmra.mxu0 %v519
  %v563 = vpop.f32.mrf.mxu0
  %v564 = vadd.f32 0.0, %v563
  %v565 = vpop.f32.mrf.mxu0
  %v566 = vpop.f32.mrf.mxu0
  %v567 = vadd.f32 0.0, %v566
  %v568 = vpop.f32.mrf.mxu0
  %569 = vdwg.mxu0
  %s570 = scalar_lea.vmem %s3, 16
  %v571 = vld [vmem:[%s570] sm:$0xf]
  %v572 = vld [vmem:[%s570 + $0x4] sm:$0xf]
  %v573 = vld [vmem:[%s570 + $0x8] sm:$0xf]
  %v574 = vld [vmem:[%s570 + $0xc] sm:$0xf]
  %s575 = scalar_lea.vmem %s3, 32
  %v576 = vld [vmem:[%s575] sm:$0xf]
  %v577 = vld [vmem:[%s575 + $0x4] sm:$0xf]
  %v578 = vld [vmem:[%s575 + $0x8] sm:$0xf]
  %v579 = vld [vmem:[%s575 + $0xc] sm:$0xf]
  %v584 = vunpack.c.l.b16 %v576
  %v585 = vunpack.c.l.b16 %v577
  %v586 = vunpack.c.l.b16 %v578
  %v587 = vunpack.c.l.b16 %v579
  %v588 = vpack.c.b16 %v585, %v584
  %v589 = vpack.c.b16 %v587, %v586
  %592 = vmatprep.subr.bf16.mxu0 0
  %593 = vmatpush1.bf16.msra.mxu0 0
  %594 = vmatprep.subr.bf16.mxu0 0
  %595 = vmatpush1.bf16.msra.mxu0 0
  %596 = vmatprep.subr.bf16.mxu0 0
  %597 = vmatpush1.bf16.msra.mxu0 0
  %598 = vmatprep.subr.bf16.mxu0 0
  %599 = vmatpush1.bf16.msra.mxu0 0
  %600 = vmatprep.subr.bf16.mxu0 0
  %601 = vmatpush1.bf16.msra.mxu0 0
  %602 = vmatprep.subr.bf16.mxu0 0
  %603 = vmatpush1.bf16.msra.mxu0 0
  %604 = vmatprep.subr.bf16.mxu0 0
  %605 = vmatpush1.bf16.msra.mxu0 %v589
  %606 = vmatprep.subr.bf16.mxu0 0
  %607 = vmatpush1.bf16.msra.mxu0 %v588
  %608 = vmatprep.subr.bf16.mxu0 0
  %609 = vmatpush2.bf16.msra.mxu0 0
  %610 = vmatprep.subr.bf16.mxu0 0
  %611 = vmatpush2.bf16.msra.mxu0 0
  %612 = vmatprep.subr.bf16.mxu0 0
  %613 = vmatpush2.bf16.msra.mxu0 0
  %614 = vmatprep.subr.bf16.mxu0 0
  %615 = vmatpush2.bf16.msra.mxu0 0
  %616 = vmatprep.subr.bf16.mxu0 0
  %617 = vmatpush2.bf16.msra.mxu0 0
  %618 = vmatprep.subr.bf16.mxu0 0
  %619 = vmatpush2.bf16.msra.mxu0 0
  %620 = vmatprep.subr.bf16.mxu0 0
  %621 = vmatpush2.bf16.msra.mxu0 0
  %622 = vmatprep.subr.bf16.mxu0 0
  %623 = vmatpush2.bf16.msra.mxu0 0
  %624 = vmatprep.mubr.bf16.mxu0 0
  %625 = vmatmul.mubr.bf16.gmra.mxu0 %v516
  %v626 = vpop.f32.mrf.mxu0
  %v627 = vadd.f32 0.0, %v626
  %v628 = vpop.f32.mrf.mxu0
  %v629 = vpop.f32.mrf.mxu0
  %v630 = vadd.f32 0.0, %v629
  %v631 = vpop.f32.mrf.mxu0
  %632 = vmatprep.mubr.bf16.mxu0 0
  %633 = vmatmul.mubr.bf16.gmra.mxu0 %v519
  %v634 = vpop.f32.mrf.mxu0
  %v635 = vadd.f32 0.0, %v634
  %v636 = vpop.f32.mrf.mxu0
  %v637 = vpop.f32.mrf.mxu0
  %v638 = vadd.f32 0.0, %v637
  %v639 = vpop.f32.mrf.mxu0
  %640 = vdwg.mxu0
  %v641 = vld [vmem:[%s4] sm:$0x1]
  %v643 = vlaneseq
  %v644 = vshrl.u32 %v643, 7
  %v645 = vsub.s32 0, %v644
  %v646 = vrot.slane %v641, %v645
  %v652 = vunpack.c.l.b16 %v571
  %v653 = vunpack.c.l.b16 %v572
  %v654 = vunpack.c.l.b16 %v573
  %v655 = vunpack.c.l.b16 %v574
  %v656 = vpack.c.b16 %v653, %v652
  %v657 = vpack.c.b16 %v655, %v654
  %660 = vmatprep.subr.bf16.mxu0 0
  %661 = vmatpush1.bf16.msra.mxu0 0
  %662 = vmatprep.subr.bf16.mxu0 0
  %663 = vmatpush1.bf16.msra.mxu0 0
  %664 = vmatprep.subr.bf16.mxu0 0
  %665 = vmatpush1.bf16.msra.mxu0 0
  %666 = vmatprep.subr.bf16.mxu0 0
  %667 = vmatpush1.bf16.msra.mxu0 0
  %668 = vmatprep.subr.bf16.mxu0 0
  %669 = vmatpush1.bf16.msra.mxu0 0
  %670 = vmatprep.subr.bf16.mxu0 0
  %671 = vmatpush1.bf16.msra.mxu0 0
  %672 = vmatprep.subr.bf16.mxu0 0
  %673 = vmatpush1.bf16.msra.mxu0 %v657
  %674 = vmatprep.subr.bf16.mxu0 0
  %675 = vmatpush1.bf16.msra.mxu0 %v656
  %676 = vmatprep.subr.bf16.mxu0 0
  %677 = vmatpush2.bf16.msra.mxu0 0
  %678 = vmatprep.subr.bf16.mxu0 0
  %679 = vmatpush2.bf16.msra.mxu0 0
  %680 = vmatprep.subr.bf16.mxu0 0
  %681 = vmatpush2.bf16.msra.mxu0 0
  %682 = vmatprep.subr.bf16.mxu0 0
  %683 = vmatpush2.bf16.msra.mxu0 0
  %684 = vmatprep.subr.bf16.mxu0 0
  %685 = vmatpush2.bf16.msra.mxu0 0
  %686 = vmatprep.subr.bf16.mxu0 0
  %687 = vmatpush2.bf16.msra.mxu0 0
  %688 = vmatprep.subr.bf16.mxu0 0
  %689 = vmatpush2.bf16.msra.mxu0 0
  %690 = vmatprep.subr.bf16.mxu0 0
  %691 = vmatpush2.bf16.msra.mxu0 0
  %692 = vmatprep.mubr.bf16.mxu0 0
  %693 = vmatmul.mubr.bf16.gmra.mxu0 %v516
  %v694 = vpop.f32.mrf.mxu0
  %v695 = vadd.f32 %v646, %v694
  %v696 = vpop.f32.mrf.mxu0
  %v697 = vpop.f32.mrf.mxu0
  %v698 = vadd.f32 %v646, %v697
  %v699 = vpop.f32.mrf.mxu0
  %700 = vmatprep.mubr.bf16.mxu0 0
  %701 = vmatmul.mubr.bf16.gmra.mxu0 %v519
  %v702 = vpop.f32.mrf.mxu0
  %v703 = vadd.f32 %v646, %v702
  %v704 = vpop.f32.mrf.mxu0
  %v705 = vpop.f32.mrf.mxu0
  %v706 = vadd.f32 %v646, %v705
  %v707 = vpop.f32.mrf.mxu0
  %708 = vdwg.mxu0
  %v709 = vrot.slane %v556, 7
  %v710 = vrot.slane %v559, 7
  %v711 = vrot.slane %v564, 7
  %v712 = vrot.slane %v567, 7
  %v713 = vsel %vm462, %v711, %v712
  %v714 = vsel %vm462, %v710, %v711
  %v715 = vsel %vm462, %v709, %v710
  %v716 = vsel %vm462, %v712, %v709
  %v717 = vmul.f32 %v716, %v92
  %v718 = vmul.f32 %v715, %v93
  %v719 = vmul.f32 %v714, %v94
  %v720 = vmul.f32 %v713, %v95
  %v721 = vadd.f32 %v695, %v717
  %v722 = vadd.f32 %v698, %v718
  %v723 = vadd.f32 %v703, %v719
  %v724 = vadd.f32 %v706, %v720
  %v725 = vrot.slane %v627, 1
  %v726 = vrot.slane %v630, 1
  %v727 = vrot.slane %v635, 1
  %v728 = vrot.slane %v638, 1
  %v729 = vsel %vm479, %v727, %v728
  %v730 = vsel %vm479, %v726, %v727
  %v731 = vsel %vm479, %v725, %v726
  %v732 = vsel %vm479, %v728, %v725
  %v733 = vmul.f32 %v731, %v104
  %v734 = vmul.f32 %v730, %v105
  %v735 = vmul.f32 %v729, %v106
  %v736 = vmul.f32 %v732, %v107
  %v737 = vadd.f32 %v721, %v733
  %v738 = vadd.f32 %v722, %v734
  %v739 = vadd.f32 %v723, %v735
  %v740 = vadd.f32 %v724, %v736
  %v741 = vmax.f32 %v737, 0.0
  %v742 = vmax.f32 %v738, 0.0
  %v743 = vmax.f32 %v739, 0.0
  %v744 = vmax.f32 %v740, 0.0
  %v745 = vpack.c.bf16 %v742, %v741
  %v746 = vpack.c.bf16 %v744, %v743
  %v747 = vld [vmem:[%s5] sm:$0xf]
  %v748 = vld [vmem:[%s5 + $0x4] sm:$0xf]
  %v749 = vld [vmem:[%s5 + $0x8] sm:$0xf]
  %v750 = vld [vmem:[%s5 + $0xc] sm:$0xf]
  %v751 = vld [vmem:[%s5 + $0x10] sm:$0xf]
  %v752 = vld [vmem:[%s5 + $0x14] sm:$0xf]
  %v753 = vld [vmem:[%s5 + $0x18] sm:$0xf]
  %v754 = vld [vmem:[%s5 + $0x1c] sm:$0xf]
  %v755 = vld [vmem:[%s5 + $0x20] sm:$0xf]
  %v756 = vld [vmem:[%s5 + $0x24] sm:$0xf]
  %v757 = vld [vmem:[%s5 + $0x28] sm:$0xf]
  %v758 = vld [vmem:[%s5 + $0x2c] sm:$0xf]
  %v759 = vld [vmem:[%s5 + $0x30] sm:$0xf]
  %v760 = vld [vmem:[%s5 + $0x34] sm:$0xf]
  %v761 = vld [vmem:[%s5 + $0x38] sm:$0xf]
  %v762 = vld [vmem:[%s5 + $0x3c] sm:$0xf]
  %v779 = vunpack.c.l.b16 %v747
  %v780 = vunpack.c.l.b16 %v748
  %v781 = vunpack.c.l.b16 %v749
  %v782 = vunpack.c.l.b16 %v750
  %v783 = vunpack.c.l.b16 %v751
  %v784 = vunpack.c.l.b16 %v752
  %v785 = vunpack.c.l.b16 %v753
  %v786 = vunpack.c.l.b16 %v754
  %v787 = vunpack.c.l.b16 %v755
  %v788 = vunpack.c.l.b16 %v756
  %v789 = vunpack.c.l.b16 %v757
  %v790 = vunpack.c.l.b16 %v758
  %v791 = vunpack.c.l.b16 %v759
  %v792 = vunpack.c.l.b16 %v760
  %v793 = vunpack.c.l.b16 %v761
  %v794 = vunpack.c.l.b16 %v762
  %v795 = vpack.c.b16 %v780, %v779
  %v796 = vpack.c.b16 %v782, %v781
  %v797 = vpack.c.b16 %v784, %v783
  %v798 = vpack.c.b16 %v786, %v785
  %v799 = vpack.c.b16 %v788, %v787
  %v800 = vpack.c.b16 %v790, %v789
  %v801 = vpack.c.b16 %v792, %v791
  %v802 = vpack.c.b16 %v794, %v793
  %811 = vmatprep.subr.bf16.mxu0 0
  %812 = vmatpush1.bf16.msra.mxu0 %v802
  %813 = vmatprep.subr.bf16.mxu0 0
  %814 = vmatpush1.bf16.msra.mxu0 %v801
  %815 = vmatprep.subr.bf16.mxu0 0
  %816 = vmatpush1.bf16.msra.mxu0 %v800
  %817 = vmatprep.subr.bf16.mxu0 0
  %818 = vmatpush1.bf16.msra.mxu0 %v799
  %819 = vmatprep.subr.bf16.mxu0 0
  %820 = vmatpush1.bf16.msra.mxu0 %v798
  %821 = vmatprep.subr.bf16.mxu0 0
  %822 = vmatpush1.bf16.msra.mxu0 %v797
  %823 = vmatprep.subr.bf16.mxu0 0
  %824 = vmatpush1.bf16.msra.mxu0 %v796
  %825 = vmatprep.subr.bf16.mxu0 0
  %826 = vmatpush1.bf16.msra.mxu0 %v795
  %827 = vmatprep.subr.bf16.mxu0 0
  %828 = vmatpush2.bf16.msra.mxu0 0
  %829 = vmatprep.subr.bf16.mxu0 0
  %830 = vmatpush2.bf16.msra.mxu0 0
  %831 = vmatprep.subr.bf16.mxu0 0
  %832 = vmatpush2.bf16.msra.mxu0 0
  %833 = vmatprep.subr.bf16.mxu0 0
  %834 = vmatpush2.bf16.msra.mxu0 0
  %835 = vmatprep.subr.bf16.mxu0 0
  %836 = vmatpush2.bf16.msra.mxu0 0
  %837 = vmatprep.subr.bf16.mxu0 0
  %838 = vmatpush2.bf16.msra.mxu0 0
  %839 = vmatprep.subr.bf16.mxu0 0
  %840 = vmatpush2.bf16.msra.mxu0 0
  %841 = vmatprep.subr.bf16.mxu0 0
  %842 = vmatpush2.bf16.msra.mxu0 0
  %843 = vmatprep.mubr.bf16.mxu0 0
  %844 = vmatmul.mubr.bf16.gmra.mxu0 %v745
  %v845 = vpop.f32.mrf.mxu0
  %v846 = vadd.f32 0.0, %v845
  %v847 = vpop.f32.mrf.mxu0
  %v848 = vpop.f32.mrf.mxu0
  %v849 = vadd.f32 0.0, %v848
  %v850 = vpop.f32.mrf.mxu0
  %851 = vmatprep.mubr.bf16.mxu0 0
  %852 = vmatmul.mubr.bf16.gmra.mxu0 %v746
  %v853 = vpop.f32.mrf.mxu0
  %v854 = vadd.f32 0.0, %v853
  %v855 = vpop.f32.mrf.mxu0
  %v856 = vpop.f32.mrf.mxu0
  %v857 = vadd.f32 0.0, %v856
  %v858 = vpop.f32.mrf.mxu0
  %859 = vdwg.mxu0
  %s860 = scalar_lea.vmem %s5, 64
  %v861 = vld [vmem:[%s860] sm:$0xf]
  %v862 = vld [vmem:[%s860 + $0x4] sm:$0xf]
  %v863 = vld [vmem:[%s860 + $0x8] sm:$0xf]
  %v864 = vld [vmem:[%s860 + $0xc] sm:$0xf]
  %v865 = vld [vmem:[%s860 + $0x10] sm:$0xf]
  %v866 = vld [vmem:[%s860 + $0x14] sm:$0xf]
  %v867 = vld [vmem:[%s860 + $0x18] sm:$0xf]
  %v868 = vld [vmem:[%s860 + $0x1c] sm:$0xf]
  %v869 = vld [vmem:[%s860 + $0x20] sm:$0xf]
  %v870 = vld [vmem:[%s860 + $0x24] sm:$0xf]
  %v871 = vld [vmem:[%s860 + $0x28] sm:$0xf]
  %v872 = vld [vmem:[%s860 + $0x2c] sm:$0xf]
  %v873 = vld [vmem:[%s860 + $0x30] sm:$0xf]
  %v874 = vld [vmem:[%s860 + $0x34] sm:$0xf]
  %v875 = vld [vmem:[%s860 + $0x38] sm:$0xf]
  %v876 = vld [vmem:[%s860 + $0x3c] sm:$0xf]
  %s877 = scalar_lea.vmem %s5, 128
  %v878 = vld [vmem:[%s877] sm:$0xf]
  %v879 = vld [vmem:[%s877 + $0x4] sm:$0xf]
  %v880 = vld [vmem:[%s877 + $0x8] sm:$0xf]
  %v881 = vld [vmem:[%s877 + $0xc] sm:$0xf]
  %v882 = vld [vmem:[%s877 + $0x10] sm:$0xf]
  %v883 = vld [vmem:[%s877 + $0x14] sm:$0xf]
  %v884 = vld [vmem:[%s877 + $0x18] sm:$0xf]
  %v885 = vld [vmem:[%s877 + $0x1c] sm:$0xf]
  %v886 = vld [vmem:[%s877 + $0x20] sm:$0xf]
  %v887 = vld [vmem:[%s877 + $0x24] sm:$0xf]
  %v888 = vld [vmem:[%s877 + $0x28] sm:$0xf]
  %v889 = vld [vmem:[%s877 + $0x2c] sm:$0xf]
  %v890 = vld [vmem:[%s877 + $0x30] sm:$0xf]
  %v891 = vld [vmem:[%s877 + $0x34] sm:$0xf]
  %v892 = vld [vmem:[%s877 + $0x38] sm:$0xf]
  %v893 = vld [vmem:[%s877 + $0x3c] sm:$0xf]
  %v910 = vunpack.c.l.b16 %v878
  %v911 = vunpack.c.l.b16 %v879
  %v912 = vunpack.c.l.b16 %v880
  %v913 = vunpack.c.l.b16 %v881
  %v914 = vunpack.c.l.b16 %v882
  %v915 = vunpack.c.l.b16 %v883
  %v916 = vunpack.c.l.b16 %v884
  %v917 = vunpack.c.l.b16 %v885
  %v918 = vunpack.c.l.b16 %v886
  %v919 = vunpack.c.l.b16 %v887
  %v920 = vunpack.c.l.b16 %v888
  %v921 = vunpack.c.l.b16 %v889
  %v922 = vunpack.c.l.b16 %v890
  %v923 = vunpack.c.l.b16 %v891
  %v924 = vunpack.c.l.b16 %v892
  %v925 = vunpack.c.l.b16 %v893
  %v926 = vpack.c.b16 %v911, %v910
  %v927 = vpack.c.b16 %v913, %v912
  %v928 = vpack.c.b16 %v915, %v914
  %v929 = vpack.c.b16 %v917, %v916
  %v930 = vpack.c.b16 %v919, %v918
  %v931 = vpack.c.b16 %v921, %v920
  %v932 = vpack.c.b16 %v923, %v922
  %v933 = vpack.c.b16 %v925, %v924
  %942 = vmatprep.subr.bf16.mxu0 0
  %943 = vmatpush1.bf16.msra.mxu0 %v933
  %944 = vmatprep.subr.bf16.mxu0 0
  %945 = vmatpush1.bf16.msra.mxu0 %v932
  %946 = vmatprep.subr.bf16.mxu0 0
  %947 = vmatpush1.bf16.msra.mxu0 %v931
  %948 = vmatprep.subr.bf16.mxu0 0
  %949 = vmatpush1.bf16.msra.mxu0 %v930
  %950 = vmatprep.subr.bf16.mxu0 0
  %951 = vmatpush1.bf16.msra.mxu0 %v929
  %952 = vmatprep.subr.bf16.mxu0 0
  %953 = vmatpush1.bf16.msra.mxu0 %v928
  %954 = vmatprep.subr.bf16.mxu0 0
  %955 = vmatpush1.bf16.msra.mxu0 %v927
  %956 = vmatprep.subr.bf16.mxu0 0
  %957 = vmatpush1.bf16.msra.mxu0 %v926
  %958 = vmatprep.subr.bf16.mxu0 0
  %959 = vmatpush2.bf16.msra.mxu0 0
  %960 = vmatprep.subr.bf16.mxu0 0
  %961 = vmatpush2.bf16.msra.mxu0 0
  %962 = vmatprep.subr.bf16.mxu0 0
  %963 = vmatpush2.bf16.msra.mxu0 0
  %964 = vmatprep.subr.bf16.mxu0 0
  %965 = vmatpush2.bf16.msra.mxu0 0
  %966 = vmatprep.subr.bf16.mxu0 0
  %967 = vmatpush2.bf16.msra.mxu0 0
  %968 = vmatprep.subr.bf16.mxu0 0
  %969 = vmatpush2.bf16.msra.mxu0 0
  %970 = vmatprep.subr.bf16.mxu0 0
  %971 = vmatpush2.bf16.msra.mxu0 0
  %972 = vmatprep.subr.bf16.mxu0 0
  %973 = vmatpush2.bf16.msra.mxu0 0
  %974 = vmatprep.mubr.bf16.mxu0 0
  %975 = vmatmul.mubr.bf16.gmra.mxu0 %v745
  %v976 = vpop.f32.mrf.mxu0
  %v977 = vadd.f32 0.0, %v976
  %v978 = vpop.f32.mrf.mxu0
  %v979 = vpop.f32.mrf.mxu0
  %v980 = vadd.f32 0.0, %v979
  %v981 = vpop.f32.mrf.mxu0
  %982 = vmatprep.mubr.bf16.mxu0 0
  %983 = vmatmul.mubr.bf16.gmra.mxu0 %v746
  %v984 = vpop.f32.mrf.mxu0
  %v985 = vadd.f32 0.0, %v984
  %v986 = vpop.f32.mrf.mxu0
  %v987 = vpop.f32.mrf.mxu0
  %v988 = vadd.f32 0.0, %v987
  %v989 = vpop.f32.mrf.mxu0
  %990 = vdwg.mxu0
  %v991 = vld [vmem:[%s6] sm:$0x1]
  %v993 = vlaneseq
  %v994 = vshrl.u32 %v993, 7
  %v995 = vsub.s32 0, %v994
  %v996 = vrot.slane %v991, %v995
  %v1014 = vunpack.c.l.b16 %v861
  %v1015 = vunpack.c.l.b16 %v862
  %v1016 = vunpack.c.l.b16 %v863
  %v1017 = vunpack.c.l.b16 %v864
  %v1018 = vunpack.c.l.b16 %v865
  %v1019 = vunpack.c.l.b16 %v866
  %v1020 = vunpack.c.l.b16 %v867
  %v1021 = vunpack.c.l.b16 %v868
  %v1022 = vunpack.c.l.b16 %v869
  %v1023 = vunpack.c.l.b16 %v870
  %v1024 = vunpack.c.l.b16 %v871
  %v1025 = vunpack.c.l.b16 %v872
  %v1026 = vunpack.c.l.b16 %v873
  %v1027 = vunpack.c.l.b16 %v874
  %v1028 = vunpack.c.l.b16 %v875
  %v1029 = vunpack.c.l.b16 %v876
  %v1030 = vpack.c.b16 %v1015, %v1014
  %v1031 = vpack.c.b16 %v1017, %v1016
  %v1032 = vpack.c.b16 %v1019, %v1018
  %v1033 = vpack.c.b16 %v1021, %v1020
  %v1034 = vpack.c.b16 %v1023, %v1022
  %v1035 = vpack.c.b16 %v1025, %v1024
  %v1036 = vpack.c.b16 %v1027, %v1026
  %v1037 = vpack.c.b16 %v1029, %v1028
  %1046 = vmatprep.subr.bf16.mxu0 0
  %1047 = vmatpush1.bf16.msra.mxu0 %v1037
  %1048 = vmatprep.subr.bf16.mxu0 0
  %1049 = vmatpush1.bf16.msra.mxu0 %v1036
  %1050 = vmatprep.subr.bf16.mxu0 0
  %1051 = vmatpush1.bf16.msra.mxu0 %v1035
  %1052 = vmatprep.subr.bf16.mxu0 0
  %1053 = vmatpush1.bf16.msra.mxu0 %v1034
  %1054 = vmatprep.subr.bf16.mxu0 0
  %1055 = vmatpush1.bf16.msra.mxu0 %v1033
  %1056 = vmatprep.subr.bf16.mxu0 0
  %1057 = vmatpush1.bf16.msra.mxu0 %v1032
  %1058 = vmatprep.subr.bf16.mxu0 0
  %1059 = vmatpush1.bf16.msra.mxu0 %v1031
  %1060 = vmatprep.subr.bf16.mxu0 0
  %1061 = vmatpush1.bf16.msra.mxu0 %v1030
  %1062 = vmatprep.subr.bf16.mxu0 0
  %1063 = vmatpush2.bf16.msra.mxu0 0
  %1064 = vmatprep.subr.bf16.mxu0 0
  %1065 = vmatpush2.bf16.msra.mxu0 0
  %1066 = vmatprep.subr.bf16.mxu0 0
  %1067 = vmatpush2.bf16.msra.mxu0 0
  %1068 = vmatprep.subr.bf16.mxu0 0
  %1069 = vmatpush2.bf16.msra.mxu0 0
  %1070 = vmatprep.subr.bf16.mxu0 0
  %1071 = vmatpush2.bf16.msra.mxu0 0
  %1072 = vmatprep.subr.bf16.mxu0 0
  %1073 = vmatpush2.bf16.msra.mxu0 0
  %1074 = vmatprep.subr.bf16.mxu0 0
  %1075 = vmatpush2.bf16.msra.mxu0 0
  %1076 = vmatprep.subr.bf16.mxu0 0
  %1077 = vmatpush2.bf16.msra.mxu0 0
  %1078 = vmatprep.mubr.bf16.mxu0 0
  %1079 = vmatmul.mubr.bf16.gmra.mxu0 %v745
  %v1080 = vpop.f32.mrf.mxu0
  %v1081 = vadd.f32 %v996, %v1080
  %v1082 = vpop.f32.mrf.mxu0
  %v1083 = vpop.f32.mrf.mxu0
  %v1084 = vadd.f32 %v996, %v1083
  %v1085 = vpop.f32.mrf.mxu0
  %1086 = vmatprep.mubr.bf16.mxu0 0
  %1087 = vmatmul.mubr.bf16.gmra.mxu0 %v746
  %v1088 = vpop.f32.mrf.mxu0
  %v1089 = vadd.f32 %v996, %v1088
  %v1090 = vpop.f32.mrf.mxu0
  %v1091 = vpop.f32.mrf.mxu0
  %v1092 = vadd.f32 %v996, %v1091
  %v1093 = vpop.f32.mrf.mxu0
  %1094 = vdwg.mxu0
  %v1095 = vrot.slane %v846, 7
  %v1096 = vrot.slane %v849, 7
  %v1097 = vrot.slane %v854, 7
  %v1098 = vrot.slane %v857, 7
  %v1099 = vsel %vm462, %v1097, %v1098
  %v1100 = vsel %vm462, %v1096, %v1097
  %v1101 = vsel %vm462, %v1095, %v1096
  %v1102 = vsel %vm462, %v1098, %v1095
  %v1103 = vmul.f32 %v1102, %v92
  %v1104 = vmul.f32 %v1101, %v93
  %v1105 = vmul.f32 %v1100, %v94
  %v1106 = vmul.f32 %v1099, %v95
  %v1107 = vadd.f32 %v1081, %v1103
  %v1108 = vadd.f32 %v1084, %v1104
  %v1109 = vadd.f32 %v1089, %v1105
  %v1110 = vadd.f32 %v1092, %v1106
  %v1111 = vrot.slane %v977, 1
  %v1112 = vrot.slane %v980, 1
  %v1113 = vrot.slane %v985, 1
  %v1114 = vrot.slane %v988, 1
  %v1115 = vsel %vm479, %v1113, %v1114
  %v1116 = vsel %vm479, %v1112, %v1113
  %v1117 = vsel %vm479, %v1111, %v1112
  %v1118 = vsel %vm479, %v1114, %v1111
  %v1119 = vmul.f32 %v1117, %v104
  %v1120 = vmul.f32 %v1116, %v105
  %v1121 = vmul.f32 %v1115, %v106
  %v1122 = vmul.f32 %v1118, %v107
  %v1123 = vadd.f32 %v1107, %v1119
  %v1124 = vadd.f32 %v1108, %v1120
  %v1125 = vadd.f32 %v1109, %v1121
  %v1126 = vadd.f32 %v1110, %v1122
  %v1127 = vadd.f32 %v27, %v1123
  %v1128 = vadd.f32 %v28, %v1124
  %v1129 = vadd.f32 %v29, %v1125
  %v1130 = vadd.f32 %v30, %v1126
  %1131 = vst [vmem:[%s7] sm:$0xff] %v1127
  %1132 = vst [vmem:[%s7 + $0x8] sm:$0xff] %v1128
  %1133 = vst [vmem:[%s7 + $0x10] sm:$0xff] %v1129
  %1134 = vst [vmem:[%s7 + $0x18] sm:$0xff] %v1130
  // Predicated region
  $region30: #{reslayer_forward.1} parent=0 // pred_check
    _
  $region31: #{reslayer_forward.1} parent=0 // pred_check_branch
    %1136 = sbr.rel (0) target = $region33
  $region32: #{reslayer_forward.1} parent=0 // pred_region
    _
  $region33: #{reslayer_forward.1} parent=0 // pred_fallthru
    _
  // Predicated region
  $region34: #{reslayer_forward.1} parent=0 // pred_check
    _
  $region35: #{reslayer_forward.1} parent=0 // pred_check_branch
    %1138 = sbr.rel (0) target = $region37
  $region36: #{reslayer_forward.1} parent=0 // pred_region
    _
  $region37: #{reslayer_forward.1} parent=0 // pred_fallthru
    _

</llo_original>
